<compile_context>
chip_gen: v5e
topology: v5e:2x2
jax: 0.10.0
libtpu: 0.0.40
codegen_flags: <defaults>
</compile_context>

<pallas_src>
import jax
import jax.numpy as jnp
from jax import lax
from jax.experimental import pallas as pl


def _attention_kernel(x2d_ref, w_mv_ref, w_t_ref, vecs_ref, out_ref):
    """x2d : [C, B*N] f32 feature (channels on sublanes, (b, n) on lanes).
       w_mv: [2C, C] bf16 stacked weight; rows [:C] = M = W_qk^T W_qk
             (block-diagonal, tied q/k folded into the Gram), rows [C:] = W_v.
       w_t : [C, C] bf16 trans_conv weight (b_t cancelled by training-mode BN).
       vecs: [C, 3] f32 packed per-channel vectors: b_v | bn_gamma | bn_beta.
       out : [B, C, N] f32."""
    B = out_ref.shape[0]
    C = out_ref.shape[1]
    N = out_ref.shape[2]

    w_mv = w_mv_ref[...]                               # [2C, C] bf16
    w_t = w_t_ref[...]                                 # [C, C]  bf16
    vecs = vecs_ref[...]                               # [C, 3]  f32
    b_v = vecs[:, 0:1]                                 # [C, 1]
    gamma = vecs[:, 1:2]
    beta = vecs[:, 2:3]

    diff_tiles = []
    for b in range(B):                                 # tiny static batch, unrolled
        lo = b * N                                     # 128-lane aligned slices
        x_b = x2d_ref[:, lo:lo + N]                    # [C, N] f32 (per-batch read)
        x_bf = x_b.astype(jnp.bfloat16)

        # One stacked MXU matmul per batch: top half = M @ X_b (for the Gram),
        # bottom half = W_v @ X_b (value projection, bias added below).
        proj = jnp.dot(w_mv, x_bf, preferred_element_type=jnp.float32)   # [2C, N]
        a_b = proj[:C, :]                              # M @ X_b   (f32)
        v_b = proj[C:, :] + b_v                        # value     (f32)

        # energy = X_b^T (M X_b) == Q^T K (tied weights). In-kernel XLU
        # transpose of the [C, N] tile; f32 operands here since energy feeds exp.
        x_t = jnp.transpose(x_b)                       # [N, C] f32
        energy = jnp.dot(x_t, a_b, preferred_element_type=jnp.float32)   # [N, N]

        # softmax over the key dim (last); exact divide for parity with torch
        energy = energy - jnp.max(energy, axis=-1, keepdims=True)
        e = jnp.exp(energy)
        attn = e / jnp.sum(e, axis=-1, keepdims=True)
        # PCT-style renorm: divide each column by its (query-dim) sum
        attn = attn * pl.reciprocal(1e-9 + jnp.sum(attn, axis=0, keepdims=True),
                                    approx=True)

        # out_b = value_b @ attn_b  -> [C, N]
        o_b = jnp.dot(v_b.astype(jnp.bfloat16), attn.astype(jnp.bfloat16),
                      preferred_element_type=jnp.float32)
        diff_tiles.append(x_b - o_b)                   # feature - out (register-resident)

    # Whole-B*N trans_conv on the register-resident diff tiles (lane-aligned
    # concat; no VMEM scratch round-trip).  b_t dropped: it cancels in BN.
    diff2d = diff_tiles[0] if B == 1 else jnp.concatenate(diff_tiles, axis=1)
    y2d = jnp.dot(w_t, diff2d.astype(jnp.bfloat16),
                  preferred_element_type=jnp.float32)                    # [C, B*N]

    # BatchNorm1d (training mode): per-channel stats over (B, N) == lanes,
    # biased variance via E[y^2] - mean^2 (two independent XLU reductions),
    # eps=1e-5, folded into a single FMA; then ReLU.
    inv_bn = 1.0 / float(B * N)
    mean = jnp.sum(y2d, axis=1, keepdims=True) * inv_bn                  # [C, 1]
    meansq = jnp.sum(y2d * y2d, axis=1, keepdims=True) * inv_bn          # [C, 1]
    var = meansq - mean * mean
    scale = gamma * lax.rsqrt(var + 1e-5)
    shift = beta - mean * scale
    z2d = jnp.maximum(y2d * scale + shift, 0.0)

    # residual add; lane-dense [C, 128] stores directly into the [B, C, N] output
    for b in range(B):
        lo = b * N
        out_ref[b, :, :] = x2d_ref[:, lo:lo + N] + z2d[:, lo:lo + N]


def attention_forward(feature, params, gp):
    """feature: [B, C, N] f32 (C == ch_in == ch_hidden, as required by the
    module's reshape / residual).  Returns [B, C, N] f32."""
    B, C, N = feature.shape
    d = C // gp

    # Block-diagonal dense form of the grouped (tied) q/k 1x1 conv weight,
    # folded into the Gram matrix M = W^T W (exact: Q^T Q = X^T W^T W X).
    blocks = params['w_qk'].reshape(gp, d, d).astype(jnp.float32)        # [gp, d, d]
    eye = jnp.eye(gp, dtype=jnp.float32)
    w_qk_bd = jnp.einsum('gij,gh->gihj', blocks, eye).reshape(C, C)      # [C_out, C_in]
    m = jnp.transpose(w_qk_bd) @ w_qk_bd                                 # [C, C] f32

    # Stack M with W_v -> single [2C, C] MXU weight (one projection matmul).
    w_mv = jnp.concatenate(
        [m, params['w_v'].astype(jnp.float32)], axis=0).astype(jnp.bfloat16)

    # Pack the per-channel vectors into one [C, 3] block (one DMA).
    vecs = jnp.stack([params['b_v'], params['bn_gamma'], params['bn_beta']],
                     axis=1).astype(jnp.float32)                         # [C, 3]

    # Layout plumbing (wrapper-side, XLA): channels-on-sublane slab.
    x2d = jnp.transpose(feature, (1, 0, 2)).reshape(C, B * N).astype(jnp.float32)

    out = pl.pallas_call(
        _attention_kernel,
        out_shape=jax.ShapeDtypeStruct((B, C, N), jnp.float32),
        in_specs=[
            pl.BlockSpec((C, B * N), lambda: (0, 0)),    # x2d (f32)
            pl.BlockSpec((2 * C, C), lambda: (0, 0)),    # stacked [M; W_v] (bf16)
            pl.BlockSpec((C, C), lambda: (0, 0)),        # w_t (bf16)
            pl.BlockSpec((C, 3), lambda: (0, 0)),        # packed b_v|gamma|beta
        ],
        out_specs=pl.BlockSpec((B, C, N), lambda: (0, 0, 0)),
    )(x2d, w_mv, params['w_t'].astype(jnp.bfloat16), vecs)
    return out


def attention_reference(feature, params, gp):
    """Pure-JAX f32 reference mirroring the PyTorch forward (for verification)."""
    B, C, N = feature.shape
    d = C // gp
    blocks = params['w_qk'].reshape(gp, d, d)
    feat_g = feature.reshape(B, gp, d, N)
    q = jnp.einsum('goi,bgin->bgon', blocks, feat_g)            # [B, gp, d, N]
    query = jnp.transpose(q, (0, 1, 3, 2))                      # [B, gp, N, d]
    key = q                                                     # tied weights
    value = jnp.einsum('oc,bcn->bon', params['w_v'], feature) \
        + params['b_v'][None, :, None]
    energy = jnp.einsum('bgnd,bgdm->bnm', query, key)           # sum over groups
    attn = jax.nn.softmax(energy, axis=-1)
    attn = attn / (1e-9 + attn.sum(axis=1, keepdims=True))
    out = jnp.einsum('bcn,bnm->bcm', value, attn)
    diff = feature - out
    y = jnp.einsum('oc,bcn->bon', params['w_t'], diff) + params['b_t'][None, :, None]
    mean = y.mean(axis=(0, 2), keepdims=True)
    var = ((y - mean) ** 2).mean(axis=(0, 2), keepdims=True)
    z = (y - mean) / jnp.sqrt(var + 1e-5)
    z = z * params['bn_gamma'][None, :, None] + params['bn_beta'][None, :, None]
    return feature + jnp.maximum(z, 0.0)


if __name__ == "__main__":
    # ch_in == ch_hidden is required by the module's reshape(B, gp, ch//gp, N)
    # and the (feature - out) residual; gp divides both.
    B, C, N, GP = 2, 32, 128, 4
    D = C // GP

    key = jax.random.PRNGKey(0)
    ks = jax.random.split(key, 6)

    def _uniform(k, shape, fan_in):
        bound = 1.0 / float(fan_in) ** 0.5
        return jax.random.uniform(k, shape, jnp.float32, -bound, bound)

    feature = jax.random.normal(ks[0], (B, C, N), jnp.float32)
    params = {
        # q_conv.weight == k_conv.weight (tied), grouped: [ch_hidden, ch_in//gp]
        'w_qk': _uniform(ks[1], (C, D), D),
        'w_v': _uniform(ks[2], (C, C), C),
        'b_v': _uniform(ks[3], (C,), C),
        'w_t': _uniform(ks[4], (C, C), C),
        'b_t': _uniform(ks[5], (C,), C),   # used only by the reference; cancels in BN
        # nn.BatchNorm1d defaults
        'bn_gamma': jnp.ones((C,), jnp.float32),
        'bn_beta': jnp.zeros((C,), jnp.float32),
    }

    out = attention_forward(feature, params, GP)
    jax.block_until_ready(out)

    ref = attention_reference(feature, params, GP)
    assert out.shape == (B, C, N)
    max_err = float(jnp.max(jnp.abs(out - ref)))
    # bf16 MXU operands (projection / value / trans_conv) + approx renorm
    # reciprocal => tolerance a few 1e-2
    assert jnp.allclose(out, ref, atol=5e-2, rtol=5e-2), max_err

    print("KERNEL_OK")
</pallas_src>

<mosaic_0001>
module attributes {stable_mosaic.version = 11 : i64} {
  func.func @_attention_kernel(%arg0: memref<32x256xf32, #tpu.memory_space<vmem>>, %arg1: memref<64x32xbf16, #tpu.memory_space<vmem>>, %arg2: memref<32x32xbf16, #tpu.memory_space<vmem>>, %arg3: memref<32x3xf32, #tpu.memory_space<vmem>>, %arg4: memref<2x32x128xf32, #tpu.memory_space<vmem>>) attributes {dimension_semantics = [], scalar_prefetch = 0 : i64, scratch_operands = 0 : i64, tpu.core_type = #tpu.core_type<tc>} {
    %c0 = arith.constant 0 : index
    %c0_0 = arith.constant 0 : index
    %0 = vector.load %arg1[%c0, %c0_0] : memref<64x32xbf16, #tpu.memory_space<vmem>>, vector<64x32xbf16>
    %c0_1 = arith.constant 0 : index
    %c0_2 = arith.constant 0 : index
    %1 = vector.load %arg2[%c0_1, %c0_2] : memref<32x32xbf16, #tpu.memory_space<vmem>>, vector<32x32xbf16>
    %c0_3 = arith.constant 0 : index
    %c0_4 = arith.constant 0 : index
    %2 = vector.load %arg3[%c0_3, %c0_4] : memref<32x3xf32, #tpu.memory_space<vmem>>, vector<32x3xf32>
    %3 = vector.extract_strided_slice %2 {offsets = [0, 0], sizes = [32, 1], strides = [1, 1]} : vector<32x3xf32> to vector<32x1xf32>
    %4 = vector.extract_strided_slice %2 {offsets = [0, 1], sizes = [32, 1], strides = [1, 1]} : vector<32x3xf32> to vector<32x1xf32>
    %5 = vector.extract_strided_slice %2 {offsets = [0, 2], sizes = [32, 1], strides = [1, 1]} : vector<32x3xf32> to vector<32x1xf32>
    %c0_5 = arith.constant 0 : index
    %c0_6 = arith.constant 0 : index
    %6 = vector.load %arg0[%c0_5, %c0_6] : memref<32x256xf32, #tpu.memory_space<vmem>>, vector<32x128xf32>
    %7 = arith.truncf %6 : vector<32x128xf32> to vector<32x128xbf16>
    %cst = arith.constant dense<0.000000e+00> : vector<64x128xf32>
    %8 = tpu.matmul %0, %7, %cst {dimension_numbers = #tpu.dot_dimension_numbers<[1], [0], [0], [1], [0, 0, 1, 1], [], []>} : vector<64x32xbf16>, vector<32x128xbf16>, vector<64x128xf32> -> vector<64x128xf32>
    %9 = vector.extract_strided_slice %8 {offsets = [0, 0], sizes = [32, 128], strides = [1, 1]} : vector<64x128xf32> to vector<32x128xf32>
    %10 = vector.extract_strided_slice %8 {offsets = [32, 0], sizes = [32, 128], strides = [1, 1]} : vector<64x128xf32> to vector<32x128xf32>
    %11 = vector.broadcast %3 : vector<32x1xf32> to vector<32x128xf32>
    %12 = arith.addf %10, %11 : vector<32x128xf32>
    %13 = tpu.transpose %6, [1, 0] : vector<32x128xf32> -> vector<128x32xf32>
    %cst_7 = arith.constant dense<0.000000e+00> : vector<128x128xf32>
    %14 = tpu.matmul %13, %9, %cst_7 {dimension_numbers = #tpu.dot_dimension_numbers<[1], [0], [0], [1], [0, 0, 1, 1], [], []>} : vector<128x32xf32>, vector<32x128xf32>, vector<128x128xf32> -> vector<128x128xf32>
    %cst_8 = arith.constant dense<0xFF800000> : vector<128xf32>
    %15 = vector.multi_reduction <maximumf>, %14, %cst_8 [1] : vector<128x128xf32> to vector<128xf32>
    %16 = vector.shape_cast %15 : vector<128xf32> to vector<128x1xf32>
    %17 = vector.broadcast %16 : vector<128x1xf32> to vector<128x128xf32>
    %18 = arith.subf %14, %17 : vector<128x128xf32>
    %19 = math.exp %18 : vector<128x128xf32>
    %cst_9 = arith.constant dense<0.000000e+00> : vector<128xf32>
    %20 = vector.multi_reduction <add>, %19, %cst_9 [1] : vector<128x128xf32> to vector<128xf32>
    %21 = vector.shape_cast %20 : vector<128xf32> to vector<128x1xf32>
    %22 = vector.broadcast %21 : vector<128x1xf32> to vector<128x128xf32>
    %23 = arith.divf %19, %22 : vector<128x128xf32>
    %cst_10 = arith.constant dense<0.000000e+00> : vector<128xf32>
    %24 = vector.multi_reduction <add>, %23, %cst_10 [0] : vector<128x128xf32> to vector<128xf32>
    %25 = vector.shape_cast %24 : vector<128xf32> to vector<1x128xf32>
    %cst_11 = arith.constant 9.99999971E-10 : f32
    %26 = vector.broadcast %cst_11 : f32 to vector<1x128xf32>
    %27 = arith.addf %26, %25 : vector<1x128xf32>
    %28 = tpu.reciprocal %27 {approx = true} : vector<1x128xf32> -> vector<1x128xf32>
    %29 = vector.broadcast %28 : vector<1x128xf32> to vector<128x128xf32>
    %30 = arith.mulf %23, %29 : vector<128x128xf32>
    %31 = arith.truncf %12 : vector<32x128xf32> to vector<32x128xbf16>
    %32 = arith.truncf %30 : vector<128x128xf32> to vector<128x128xbf16>
    %cst_12 = arith.constant dense<0.000000e+00> : vector<32x128xf32>
    %33 = tpu.matmul %31, %32, %cst_12 {dimension_numbers = #tpu.dot_dimension_numbers<[1], [0], [0], [1], [0, 0, 1, 1], [], []>} : vector<32x128xbf16>, vector<128x128xbf16>, vector<32x128xf32> -> vector<32x128xf32>
    %34 = arith.subf %6, %33 : vector<32x128xf32>
    %c0_13 = arith.constant 0 : index
    %c128 = arith.constant 128 : index
    %35 = vector.load %arg0[%c0_13, %c128] : memref<32x256xf32, #tpu.memory_space<vmem>>, vector<32x128xf32>
    %36 = arith.truncf %35 : vector<32x128xf32> to vector<32x128xbf16>
    %cst_14 = arith.constant dense<0.000000e+00> : vector<64x128xf32>
    %37 = tpu.matmul %0, %36, %cst_14 {dimension_numbers = #tpu.dot_dimension_numbers<[1], [0], [0], [1], [0, 0, 1, 1], [], []>} : vector<64x32xbf16>, vector<32x128xbf16>, vector<64x128xf32> -> vector<64x128xf32>
    %38 = vector.extract_strided_slice %37 {offsets = [0, 0], sizes = [32, 128], strides = [1, 1]} : vector<64x128xf32> to vector<32x128xf32>
    %39 = vector.extract_strided_slice %37 {offsets = [32, 0], sizes = [32, 128], strides = [1, 1]} : vector<64x128xf32> to vector<32x128xf32>
    %40 = vector.broadcast %3 : vector<32x1xf32> to vector<32x128xf32>
    %41 = arith.addf %39, %40 : vector<32x128xf32>
    %42 = tpu.transpose %35, [1, 0] : vector<32x128xf32> -> vector<128x32xf32>
    %cst_15 = arith.constant dense<0.000000e+00> : vector<128x128xf32>
    %43 = tpu.matmul %42, %38, %cst_15 {dimension_numbers = #tpu.dot_dimension_numbers<[1], [0], [0], [1], [0, 0, 1, 1], [], []>} : vector<128x32xf32>, vector<32x128xf32>, vector<128x128xf32> -> vector<128x128xf32>
    %cst_16 = arith.constant dense<0xFF800000> : vector<128xf32>
    %44 = vector.multi_reduction <maximumf>, %43, %cst_16 [1] : vector<128x128xf32> to vector<128xf32>
    %45 = vector.shape_cast %44 : vector<128xf32> to vector<128x1xf32>
    %46 = vector.broadcast %45 : vector<128x1xf32> to vector<128x128xf32>
    %47 = arith.subf %43, %46 : vector<128x128xf32>
    %48 = math.exp %47 : vector<128x128xf32>
    %cst_17 = arith.constant dense<0.000000e+00> : vector<128xf32>
    %49 = vector.multi_reduction <add>, %48, %cst_17 [1] : vector<128x128xf32> to vector<128xf32>
    %50 = vector.shape_cast %49 : vector<128xf32> to vector<128x1xf32>
    %51 = vector.broadcast %50 : vector<128x1xf32> to vector<128x128xf32>
    %52 = arith.divf %48, %51 : vector<128x128xf32>
    %cst_18 = arith.constant dense<0.000000e+00> : vector<128xf32>
    %53 = vector.multi_reduction <add>, %52, %cst_18 [0] : vector<128x128xf32> to vector<128xf32>
    %54 = vector.shape_cast %53 : vector<128xf32> to vector<1x128xf32>
    %cst_19 = arith.constant 9.99999971E-10 : f32
    %55 = vector.broadcast %cst_19 : f32 to vector<1x128xf32>
    %56 = arith.addf %55, %54 : vector<1x128xf32>
    %57 = tpu.reciprocal %56 {approx = true} : vector<1x128xf32> -> vector<1x128xf32>
    %58 = vector.broadcast %57 : vector<1x128xf32> to vector<128x128xf32>
    %59 = arith.mulf %52, %58 : vector<128x128xf32>
    %60 = arith.truncf %41 : vector<32x128xf32> to vector<32x128xbf16>
    %61 = arith.truncf %59 : vector<128x128xf32> to vector<128x128xbf16>
    %cst_20 = arith.constant dense<0.000000e+00> : vector<32x128xf32>
    %62 = tpu.matmul %60, %61, %cst_20 {dimension_numbers = #tpu.dot_dimension_numbers<[1], [0], [0], [1], [0, 0, 1, 1], [], []>} : vector<32x128xbf16>, vector<128x128xbf16>, vector<32x128xf32> -> vector<32x128xf32>
    %63 = arith.subf %35, %62 : vector<32x128xf32>
    %64 = tpu.concatenate %34, %63 in 1 : vector<32x128xf32>, vector<32x128xf32> -> vector<32x256xf32>
    %65 = arith.truncf %64 : vector<32x256xf32> to vector<32x256xbf16>
    %cst_21 = arith.constant dense<0.000000e+00> : vector<32x256xf32>
    %66 = tpu.matmul %1, %65, %cst_21 {dimension_numbers = #tpu.dot_dimension_numbers<[1], [0], [0], [1], [0, 0, 1, 1], [], []>} : vector<32x32xbf16>, vector<32x256xbf16>, vector<32x256xf32> -> vector<32x256xf32>
    %cst_22 = arith.constant dense<0.000000e+00> : vector<32xf32>
    %67 = vector.multi_reduction <add>, %66, %cst_22 [1] : vector<32x256xf32> to vector<32xf32>
    %68 = vector.shape_cast %67 : vector<32xf32> to vector<32x1xf32>
    %cst_23 = arith.constant 3.906250e-03 : f32
    %69 = vector.broadcast %cst_23 : f32 to vector<32x1xf32>
    %70 = arith.mulf %68, %69 : vector<32x1xf32>
    %71 = arith.mulf %66, %66 : vector<32x256xf32>
    %cst_24 = arith.constant dense<0.000000e+00> : vector<32xf32>
    %72 = vector.multi_reduction <add>, %71, %cst_24 [1] : vector<32x256xf32> to vector<32xf32>
    %73 = vector.shape_cast %72 : vector<32xf32> to vector<32x1xf32>
    %cst_25 = arith.constant 3.906250e-03 : f32
    %74 = vector.broadcast %cst_25 : f32 to vector<32x1xf32>
    %75 = arith.mulf %73, %74 : vector<32x1xf32>
    %76 = arith.mulf %70, %70 : vector<32x1xf32>
    %77 = arith.subf %75, %76 : vector<32x1xf32>
    %cst_26 = arith.constant 9.99999974E-6 : f32
    %78 = vector.broadcast %cst_26 : f32 to vector<32x1xf32>
    %79 = arith.addf %77, %78 : vector<32x1xf32>
    %80 = math.rsqrt %79 : vector<32x1xf32>
    %81 = arith.mulf %4, %80 : vector<32x1xf32>
    %82 = arith.mulf %70, %81 : vector<32x1xf32>
    %83 = arith.subf %5, %82 : vector<32x1xf32>
    %84 = vector.broadcast %81 : vector<32x1xf32> to vector<32x256xf32>
    %85 = arith.mulf %66, %84 : vector<32x256xf32>
    %86 = vector.broadcast %83 : vector<32x1xf32> to vector<32x256xf32>
    %87 = arith.addf %85, %86 : vector<32x256xf32>
    %cst_27 = arith.constant 0.000000e+00 : f32
    %88 = vector.broadcast %cst_27 : f32 to vector<32x256xf32>
    %89 = arith.maximumf %87, %88 : vector<32x256xf32>
    %c0_28 = arith.constant 0 : index
    %c0_29 = arith.constant 0 : index
    %90 = vector.load %arg0[%c0_28, %c0_29] : memref<32x256xf32, #tpu.memory_space<vmem>>, vector<32x128xf32>
    %91 = vector.extract_strided_slice %89 {offsets = [0, 0], sizes = [32, 128], strides = [1, 1]} : vector<32x256xf32> to vector<32x128xf32>
    %92 = arith.addf %90, %91 : vector<32x128xf32>
    %c0_30 = arith.constant 0 : index
    %c0_31 = arith.constant 0 : index
    %c0_32 = arith.constant 0 : index
    %93 = vector.load %arg4[%c0_30, %c0_31, %c0_32] : memref<2x32x128xf32, #tpu.memory_space<vmem>>, vector<1x32x128xf32>
    %94 = vector.shape_cast %93 : vector<1x32x128xf32> to vector<32x128xf32>
    %95 = vector.shape_cast %92 : vector<32x128xf32> to vector<1x32x128xf32>
    tpu.vector_store %arg4[%c0_30, %c0_31, %c0_32], %95 {strides = array<i32>} : memref<2x32x128xf32, #tpu.memory_space<vmem>>, vector<1x32x128xf32>,
    %c0_33 = arith.constant 0 : index
    %c128_34 = arith.constant 128 : index
    %96 = vector.load %arg0[%c0_33, %c128_34] : memref<32x256xf32, #tpu.memory_space<vmem>>, vector<32x128xf32>
    %97 = vector.extract_strided_slice %89 {offsets = [0, 128], sizes = [32, 128], strides = [1, 1]} : vector<32x256xf32> to vector<32x128xf32>
    %98 = arith.addf %96, %97 : vector<32x128xf32>
    %c1 = arith.constant 1 : index
    %c0_35 = arith.constant 0 : index
    %c0_36 = arith.constant 0 : index
    %99 = vector.load %arg4[%c1, %c0_35, %c0_36] : memref<2x32x128xf32, #tpu.memory_space<vmem>>, vector<1x32x128xf32>
    %100 = vector.shape_cast %99 : vector<1x32x128xf32> to vector<32x128xf32>
    %101 = vector.shape_cast %98 : vector<32x128xf32> to vector<1x32x128xf32>
    tpu.vector_store %arg4[%c1, %c0_35, %c0_36], %101 {strides = array<i32>} : memref<2x32x128xf32, #tpu.memory_space<vmem>>, vector<1x32x128xf32>,
    return
  }
}

</mosaic_0001>

<llo_original>
// kernel: tpu_custom_call.1
$region0: #{tpu_custom_call.1}
  #allocation0 [shape = 'u32[]', space=smem, size = 0x4, offset = 0x4, fixed_abs, tag = 'smem constant byte address 0x4 - core index']
  #allocation1 [shape = 'u32[72,128]{1,0:T(1,128)}', space=vmem, size = 0x9000, scoped, tag = 'internal scratch']
  %s0 = inlined_call_operand.vmem [shape: f32[32,256], index: 0, kind: input, shape index: {}]
  %s1 = inlined_call_operand.vmem [shape: bf16[64,32], index: 1, kind: input, shape index: {}]
  %s2 = inlined_call_operand.vmem [shape: bf16[32,32], index: 2, kind: input, shape index: {}]
  %s3 = inlined_call_operand.vmem [shape: f32[32,3], index: 3, kind: input, shape index: {}]
  %s4 = inlined_call_operand.hbm [shape: f32[2,32,128], index: 4, kind: output, shape index: {}]
  %s5 = sld [smem:[#allocation0]]
  $region26: #{tpu_custom_call.1} parent=0
    _
  %s7 = ssub.s32 1, %s5
  %s8 = scalar_select 0, %s7, %s5
  $region1: #{tpu_custom_call.1} parent=0
    #allocation2 [shape = 'u8[32768]{0}', space=vmem, size = 0x8000, scoped, tag = 'output window, operand 0, single buffered']
    #allocation3 [shape = 's32[1]{0}', space=sflag, size = 0x4, scoped, tag = 'scoped memory for tpu_custom_call.1']
    %9 = vsyncpa [#allocation3], 0
    // Predicated region
    $region2: #{tpu_custom_call.1} parent=1 // pred_check
      _
    $region3: #{tpu_custom_call.1} parent=1 // pred_check_branch
      %11 = sbr.rel (0) target = $region5
    $region4: #{tpu_custom_call.1} parent=1 // pred_region
      _
    $region5: #{tpu_custom_call.1} parent=1 // pred_fallthru
      _
    // Predicated region
    $region6: #{tpu_custom_call.1} parent=1 // pred_check
      _
    $region7: #{tpu_custom_call.1} parent=1 // pred_check_branch
      %13 = sbr.rel (0) target = $region9
    $region8: #{tpu_custom_call.1} parent=1 // pred_region
      _
    $region9: #{tpu_custom_call.1} parent=1 // pred_fallthru
      _
    // Predicated region
    $region10: #{tpu_custom_call.1} parent=1 // pred_check
      _
    $region11: #{tpu_custom_call.1} parent=1 // pred_check_branch
      %15 = sbr.rel (0) target = $region13
    $region12: #{tpu_custom_call.1} parent=1 // pred_region
      _
    $region13: #{tpu_custom_call.1} parent=1 // pred_fallthru
      _
    // Predicated region
    $region14: #{tpu_custom_call.1} parent=1 // pred_check
      _
    $region15: #{tpu_custom_call.1} parent=1 // pred_check_branch
      %17 = sbr.rel (0) target = $region17
    $region16: #{tpu_custom_call.1} parent=1 // pred_region
      _
    $region17: #{tpu_custom_call.1} parent=1 // pred_fallthru
      _
    %v19 = vld [vmem:[%s1] sm:$0xf]
    %v20 = vld [vmem:[%s1 + $0x4] sm:$0xf]
    %v21 = vld [vmem:[%s1 + $0x8] sm:$0xf]
    %v22 = vld [vmem:[%s1 + $0xc] sm:$0xf]
    %v23 = vld [vmem:[%s1 + $0x10] sm:$0xf]
    %v24 = vld [vmem:[%s1 + $0x14] sm:$0xf]
    %v25 = vld [vmem:[%s1 + $0x18] sm:$0xf]
    %v26 = vld [vmem:[%s1 + $0x1c] sm:$0xf]
    %v27 = vld [vmem:[%s2] sm:$0xf]
    %v28 = vld [vmem:[%s2 + $0x4] sm:$0xf]
    %v29 = vld [vmem:[%s2 + $0x8] sm:$0xf]
    %v30 = vld [vmem:[%s2 + $0xc] sm:$0xf]
    %v31 = vld [vmem:[%s3] sm:$0xff]
    %v32 = vld [vmem:[%s3 + $0x8] sm:$0xff]
    %v33 = vld [vmem:[%s3 + $0x10] sm:$0xff]
    %v34 = vld [vmem:[%s3 + $0x18] sm:$0xff]
    %v35 = vld [vmem:[%s0] sm:$0xff]
    %v36 = vld [vmem:[%s0 + $0x10] sm:$0xff]
    %v37 = vld [vmem:[%s0 + $0x20] sm:$0xff]
    %v38 = vld [vmem:[%s0 + $0x30] sm:$0xff]
    %v39 = vpack.c.bf16 %v36, %v35
    %v40 = vpack.c.bf16 %v38, %v37
    %v49 = vunpack.c.l.b16 %v19
    %v50 = vunpack.c.l.b16 %v20
    %v51 = vunpack.c.l.b16 %v21
    %v52 = vunpack.c.l.b16 %v22
    %v53 = vunpack.c.l.b16 %v23
    %v54 = vunpack.c.l.b16 %v24
    %v55 = vunpack.c.l.b16 %v25
    %v56 = vunpack.c.l.b16 %v26
    %v57 = vpack.c.b16 %v50, %v49
    %v58 = vpack.c.b16 %v52, %v51
    %v59 = vpack.c.b16 %v54, %v53
    %v60 = vpack.c.b16 %v56, %v55
    %vm61 = vcmask 261120
    %v63 = vsel %vm61, %v57, 0
    %v66 = vsel %vm61, %v58, 0
    %v69 = vsel %vm61, %v59, 0
    %v72 = vsel %vm61, %v60, 0
    %74 = vmatpush.bf16.msra.mxu0 0
    %75 = vmatpush.bf16.msra.mxu0 0
    %76 = vmatpush.bf16.msra.mxu0 0
    %77 = vmatpush.bf16.msra.mxu0 0
    %78 = vmatpush.bf16.msra.mxu0 0
    %79 = vmatpush.bf16.msra.mxu0 0
    %80 = vmatpush.bf16.msra.mxu0 %v40
    %81 = vmatpush.bf16.msra.mxu0 %v39
    %82 = vmatmul.bf16.gmra.mxu0 %v63
    %v83 = vpop.f32.mrf.mxu0
    %v84 = vadd.f32 0.0, %v83
    %v85 = vpop.f32.mrf.mxu0
    %v86 = vadd.f32 0.0, %v85
    %87 = vmatmul.bf16.gmra.mxu0 %v66
    %v88 = vpop.f32.mrf.mxu0
    %v89 = vadd.f32 0.0, %v88
    %v90 = vpop.f32.mrf.mxu0
    %v91 = vadd.f32 0.0, %v90
    %92 = vmatmul.bf16.gmra.mxu0 %v69
    %v93 = vpop.f32.mrf.mxu0
    %v94 = vadd.f32 0.0, %v93
    %v95 = vpop.f32.mrf.mxu0
    %v96 = vadd.f32 0.0, %v95
    %97 = vmatmul.bf16.gmra.mxu0 %v72
    %v98 = vpop.f32.mrf.mxu0
    %v99 = vadd.f32 0.0, %v98
    %v100 = vpop.f32.mrf.mxu0
    %v101 = vadd.f32 0.0, %v100
    %102 = vdwg.mxu0
    %104 = vset.pattern.permute.xlu0 0
    %105 = vperm.xlu0 %104, %v31
    %v106 = vpop.permute.xlu0 %105
    %109 = vset.pattern.permute.xlu0 0
    %110 = vperm.xlu0 %109, %v32
    %v111 = vpop.permute.xlu0 %110
    %114 = vset.pattern.permute.xlu0 0
    %115 = vperm.xlu0 %114, %v33
    %v116 = vpop.permute.xlu0 %115
    %119 = vset.pattern.permute.xlu0 0
    %120 = vperm.xlu0 %119, %v34
    %v121 = vpop.permute.xlu0 %120
    %v123 = vadd.f32 %v94, %v106
    %v124 = vadd.f32 %v96, %v111
    %v125 = vadd.f32 %v99, %v116
    %v126 = vadd.f32 %v101, %v121
    %127 = vxpose.xlu0.b32.start [1/16] %v35, 128
    %128 = vxpose.xlu0.b32.cont [2/16] %v36, 128
    %129 = vxpose.xlu0.b32.cont [3/16] %v37, 128
    %130 = vxpose.xlu0.b32.cont [4/16] %v38, 128
    %131 = vxpose.xlu0.b32.cont [5/16] 0.0, 128
    %132 = vxpose.xlu0.b32.cont [6/16] 0.0, 128
    %133 = vxpose.xlu0.b32.cont [7/16] 0.0, 128
    %134 = vxpose.xlu0.b32.cont [8/16] 0.0, 128
    %135 = vxpose.xlu0.b32.cont [9/16] 0.0, 128
    %136 = vxpose.xlu0.b32.cont [10/16] 0.0, 128
    %137 = vxpose.xlu0.b32.cont [11/16] 0.0, 128
    %138 = vxpose.xlu0.b32.cont [12/16] 0.0, 128
    %139 = vxpose.xlu0.b32.cont [13/16] 0.0, 128
    %140 = vxpose.xlu0.b32.cont [14/16] 0.0, 128
    %141 = vxpose.xlu0.b32.cont [15/16] 0.0, 128
    %142 = vxpose.xlu0.b32.end [16/16] 0.0, 128
    %v143 = vpop.trf.xlu0
    %v144 = vpop.trf.xlu0
    %v145 = vpop.trf.xlu0
    %v146 = vpop.trf.xlu0
    %v147 = vpop.trf.xlu0
    %v148 = vpop.trf.xlu0
    %v149 = vpop.trf.xlu0
    %v150 = vpop.trf.xlu0
    %v151 = vpop.trf.xlu0
    %v152 = vpop.trf.xlu0
    %v153 = vpop.trf.xlu0
    %v154 = vpop.trf.xlu0
    %v155 = vpop.trf.xlu0
    %v156 = vpop.trf.xlu0
    %v157 = vpop.trf.xlu0
    %v158 = vpop.trf.xlu0
    %v160 = vsel %vm61, %v143, 0
    %v163 = vsel %vm61, %v144, 0
    %v166 = vsel %vm61, %v145, 0
    %v169 = vsel %vm61, %v146, 0
    %v172 = vsel %vm61, %v147, 0
    %v175 = vsel %vm61, %v148, 0
    %v178 = vsel %vm61, %v149, 0
    %v181 = vsel %vm61, %v150, 0
    %v184 = vsel %vm61, %v151, 0
    %v187 = vsel %vm61, %v152, 0
    %v190 = vsel %vm61, %v153, 0
    %v193 = vsel %vm61, %v154, 0
    %v196 = vsel %vm61, %v155, 0
    %v199 = vsel %vm61, %v156, 0
    %v202 = vsel %vm61, %v157, 0
    %v205 = vsel %vm61, %v158, 0
    %207 = vmatpush.msra.mxu0 0.0
    %208 = vmatpush.msra.mxu0 0.0
    %209 = vmatpush.msra.mxu0 0.0
    %210 = vmatpush.msra.mxu0 0.0
    %211 = vmatpush.msra.mxu0 0.0
    %212 = vmatpush.msra.mxu0 0.0
    %213 = vmatpush.msra.mxu0 0.0
    %214 = vmatpush.msra.mxu0 0.0
    %215 = vmatpush.msra.mxu0 0.0
    %216 = vmatpush.msra.mxu0 0.0
    %217 = vmatpush.msra.mxu0 0.0
    %218 = vmatpush.msra.mxu0 0.0
    %219 = vmatpush.msra.mxu0 %v91
    %220 = vmatpush.msra.mxu0 %v89
    %221 = vmatpush.msra.mxu0 %v86
    %222 = vmatpush.msra.mxu0 %v84
    %223 = vmatmul.f32.gmra.mxu0 %v160
    %v224 = vpop.f32.mrf.mxu0
    %v225 = vadd.f32 0.0, %v224
    %226 = vmatmul.f32.gmra.mxu0 %v163
    %v227 = vpop.f32.mrf.mxu0
    %v228 = vadd.f32 0.0, %v227
    %229 = vmatmul.f32.gmra.mxu0 %v166
    %v230 = vpop.f32.mrf.mxu0
    %v231 = vadd.f32 0.0, %v230
    %232 = vmatmul.f32.gmra.mxu0 %v169
    %v233 = vpop.f32.mrf.mxu0
    %v234 = vadd.f32 0.0, %v233
    %235 = vmatmul.f32.gmra.mxu0 %v172
    %v236 = vpop.f32.mrf.mxu0
    %v237 = vadd.f32 0.0, %v236
    %238 = vmatmul.f32.gmra.mxu0 %v175
    %v239 = vpop.f32.mrf.mxu0
    %v240 = vadd.f32 0.0, %v239
    %241 = vmatmul.f32.gmra.mxu0 %v178
    %v242 = vpop.f32.mrf.mxu0
    %v243 = vadd.f32 0.0, %v242
    %244 = vmatmul.f32.gmra.mxu0 %v181
    %v245 = vpop.f32.mrf.mxu0
    %v246 = vadd.f32 0.0, %v245
    %247 = vmatmul.f32.gmra.mxu0 %v184
    %v248 = vpop.f32.mrf.mxu0
    %v249 = vadd.f32 0.0, %v248
    %250 = vmatmul.f32.gmra.mxu0 %v187
    %v251 = vpop.f32.mrf.mxu0
    %v252 = vadd.f32 0.0, %v251
    %253 = vmatmul.f32.gmra.mxu0 %v190
    %v254 = vpop.f32.mrf.mxu0
    %v255 = vadd.f32 0.0, %v254
    %256 = vmatmul.f32.gmra.mxu0 %v193
    %v257 = vpop.f32.mrf.mxu0
    %v258 = vadd.f32 0.0, %v257
    %259 = vmatmul.f32.gmra.mxu0 %v196
    %v260 = vpop.f32.mrf.mxu0
    %v261 = vadd.f32 0.0, %v260
    %262 = vmatmul.f32.gmra.mxu0 %v199
    %v263 = vpop.f32.mrf.mxu0
    %v264 = vadd.f32 0.0, %v263
    %265 = vmatmul.f32.gmra.mxu0 %v202
    %v266 = vpop.f32.mrf.mxu0
    %v267 = vadd.f32 0.0, %v266
    %268 = vmatmul.f32.gmra.mxu0 %v205
    %v269 = vpop.f32.mrf.mxu0
    %v270 = vadd.f32 0.0, %v269
    %271 = vdwg.mxu0
    %272 = vmax.xlane.f32.xlu0 %v225
    %v273 = vpop.xlane.xlu0 %272
    %274 = vmax.xlane.f32.xlu0 %v228
    %v275 = vpop.xlane.xlu0 %274
    %276 = vmax.xlane.f32.xlu0 %v231
    %v277 = vpop.xlane.xlu0 %276
    %278 = vmax.xlane.f32.xlu0 %v234
    %v279 = vpop.xlane.xlu0 %278
    %280 = vmax.xlane.f32.xlu0 %v237
    %v281 = vpop.xlane.xlu0 %280
    %282 = vmax.xlane.f32.xlu0 %v240
    %v283 = vpop.xlane.xlu0 %282
    %284 = vmax.xlane.f32.xlu0 %v243
    %v285 = vpop.xlane.xlu0 %284
    %286 = vmax.xlane.f32.xlu0 %v246
    %v287 = vpop.xlane.xlu0 %286
    %288 = vmax.xlane.f32.xlu0 %v249
    %v289 = vpop.xlane.xlu0 %288
    %290 = vmax.xlane.f32.xlu0 %v252
    %v291 = vpop.xlane.xlu0 %290
    %292 = vmax.xlane.f32.xlu0 %v255
    %v293 = vpop.xlane.xlu0 %292
    %294 = vmax.xlane.f32.xlu0 %v258
    %v295 = vpop.xlane.xlu0 %294
    %296 = vmax.xlane.f32.xlu0 %v261
    %v297 = vpop.xlane.xlu0 %296
    %298 = vmax.xlane.f32.xlu0 %v264
    %v299 = vpop.xlane.xlu0 %298
    %300 = vmax.xlane.f32.xlu0 %v267
    %v301 = vpop.xlane.xlu0 %300
    %302 = vmax.xlane.f32.xlu0 %v270
    %v303 = vpop.xlane.xlu0 %302
    %v304 = vsub.f32 %v225, %v273
    %v305 = vsub.f32 %v228, %v275
    %v306 = vsub.f32 %v231, %v277
    %v307 = vsub.f32 %v234, %v279
    %v308 = vsub.f32 %v237, %v281
    %v309 = vsub.f32 %v240, %v283
    %v310 = vsub.f32 %v243, %v285
    %v311 = vsub.f32 %v246, %v287
    %v312 = vsub.f32 %v249, %v289
    %v313 = vsub.f32 %v252, %v291
    %v314 = vsub.f32 %v255, %v293
    %v315 = vsub.f32 %v258, %v295
    %v316 = vsub.f32 %v261, %v297
    %v317 = vsub.f32 %v264, %v299
    %v318 = vsub.f32 %v267, %v301
    %v319 = vsub.f32 %v270, %v303
    %v320 = vmul.f32 %v304, 1.442695
    %v321 = vpow.pop %v320
    %v322 = vmul.f32 %v305, 1.442695
    %v323 = vpow.pop %v322
    %v324 = vmul.f32 %v306, 1.442695
    %v325 = vpow.pop %v324
    %v326 = vmul.f32 %v307, 1.442695
    %v327 = vpow.pop %v326
    %v328 = vmul.f32 %v308, 1.442695
    %v329 = vpow.pop %v328
    %v330 = vmul.f32 %v309, 1.442695
    %v331 = vpow.pop %v330
    %v332 = vmul.f32 %v310, 1.442695
    %v333 = vpow.pop %v332
    %v334 = vmul.f32 %v311, 1.442695
    %v335 = vpow.pop %v334
    %v336 = vmul.f32 %v312, 1.442695
    %v337 = vpow.pop %v336
    %v338 = vmul.f32 %v313, 1.442695
    %v339 = vpow.pop %v338
    %v340 = vmul.f32 %v314, 1.442695
    %v341 = vpow.pop %v340
    %v342 = vmul.f32 %v315, 1.442695
    %v343 = vpow.pop %v342
    %v344 = vmul.f32 %v316, 1.442695
    %v345 = vpow.pop %v344
    %v346 = vmul.f32 %v317, 1.442695
    %v347 = vpow.pop %v346
    %v348 = vmul.f32 %v318, 1.442695
    %v349 = vpow.pop %v348
    %v350 = vmul.f32 %v319, 1.442695
    %v351 = vpow.pop %v350
    %352 = vadd.xlane.f32.xlu0 %v321
    %v353 = vpop.xlane.xlu0 %352
    %354 = vadd.xlane.f32.xlu0 %v323
    %v355 = vpop.xlane.xlu0 %354
    %356 = vadd.xlane.f32.xlu0 %v325
    %v357 = vpop.xlane.xlu0 %356
    %358 = vadd.xlane.f32.xlu0 %v327
    %v359 = vpop.xlane.xlu0 %358
    %360 = vadd.xlane.f32.xlu0 %v329
    %v361 = vpop.xlane.xlu0 %360
    %362 = vadd.xlane.f32.xlu0 %v331
    %v363 = vpop.xlane.xlu0 %362
    %364 = vadd.xlane.f32.xlu0 %v333
    %v365 = vpop.xlane.xlu0 %364
    %366 = vadd.xlane.f32.xlu0 %v335
    %v367 = vpop.xlane.xlu0 %366
    %368 = vadd.xlane.f32.xlu0 %v337
    %v369 = vpop.xlane.xlu0 %368
    %370 = vadd.xlane.f32.xlu0 %v339
    %v371 = vpop.xlane.xlu0 %370
    %372 = vadd.xlane.f32.xlu0 %v341
    %v373 = vpop.xlane.xlu0 %372
    %374 = vadd.xlane.f32.xlu0 %v343
    %v375 = vpop.xlane.xlu0 %374
    %376 = vadd.xlane.f32.xlu0 %v345
    %v377 = vpop.xlane.xlu0 %376
    %378 = vadd.xlane.f32.xlu0 %v347
    %v379 = vpop.xlane.xlu0 %378
    %380 = vadd.xlane.f32.xlu0 %v349
    %v381 = vpop.xlane.xlu0 %380
    %382 = vadd.xlane.f32.xlu0 %v351
    %v383 = vpop.xlane.xlu0 %382
    %v384 = vrcp.pop %v353
    %v385 = vmul.f32 %v353, %v384
    %v386 = vsub.f32 1.0, %v385
    %v387 = vmul.f32 %v384, %v386
    %v388 = vadd.f32 %v384, %v387
    %vm389 = vweird.f32 %v353
    %vm390 = vweird.f32 %v384
    %vm391 = vmor %vm389, %vm390
    %v392 = vsel %vm391, %v384, %v388
    %v393 = vand.u32 2147483647, %v353
    %vm394 = vcmp.eq.f32.partialorder %v393, 8.507059e+37
    %v395 = vand.u32 %v353, 2147483648
    %v396 = vor.u32 1.1754944e-38, %v395
    %v397 = vsel %vm394, %v396, %v392
    %v398 = vmul.f32 %v321, %v397
    %v399 = vrcp.pop %v355
    %v400 = vmul.f32 %v355, %v399
    %v401 = vsub.f32 1.0, %v400
    %v402 = vmul.f32 %v399, %v401
    %v403 = vadd.f32 %v399, %v402
    %vm404 = vweird.f32 %v355
    %vm405 = vweird.f32 %v399
    %vm406 = vmor %vm404, %vm405
    %v407 = vsel %vm406, %v399, %v403
    %v408 = vand.u32 2147483647, %v355
    %vm409 = vcmp.eq.f32.partialorder %v408, 8.507059e+37
    %v410 = vand.u32 %v355, 2147483648
    %v411 = vor.u32 1.1754944e-38, %v410
    %v412 = vsel %vm409, %v411, %v407
    %v413 = vmul.f32 %v323, %v412
    %v414 = vrcp.pop %v357
    %v415 = vmul.f32 %v357, %v414
    %v416 = vsub.f32 1.0, %v415
    %v417 = vmul.f32 %v414, %v416
    %v418 = vadd.f32 %v414, %v417
    %vm419 = vweird.f32 %v357
    %vm420 = vweird.f32 %v414
    %vm421 = vmor %vm419, %vm420
    %v422 = vsel %vm421, %v414, %v418
    %v423 = vand.u32 2147483647, %v357
    %vm424 = vcmp.eq.f32.partialorder %v423, 8.507059e+37
    %v425 = vand.u32 %v357, 2147483648
    %v426 = vor.u32 1.1754944e-38, %v425
    %v427 = vsel %vm424, %v426, %v422
    %v428 = vmul.f32 %v325, %v427
    %v429 = vrcp.pop %v359
    %v430 = vmul.f32 %v359, %v429
    %v431 = vsub.f32 1.0, %v430
    %v432 = vmul.f32 %v429, %v431
    %v433 = vadd.f32 %v429, %v432
    %vm434 = vweird.f32 %v359
    %vm435 = vweird.f32 %v429
    %vm436 = vmor %vm434, %vm435
    %v437 = vsel %vm436, %v429, %v433
    %v438 = vand.u32 2147483647, %v359
    %vm439 = vcmp.eq.f32.partialorder %v438, 8.507059e+37
    %v440 = vand.u32 %v359, 2147483648
    %v441 = vor.u32 1.1754944e-38, %v440
    %v442 = vsel %vm439, %v441, %v437
    %v443 = vmul.f32 %v327, %v442
    %v444 = vrcp.pop %v361
    %v445 = vmul.f32 %v361, %v444
    %v446 = vsub.f32 1.0, %v445
    %v447 = vmul.f32 %v444, %v446
    %v448 = vadd.f32 %v444, %v447
    %vm449 = vweird.f32 %v361
    %vm450 = vweird.f32 %v444
    %vm451 = vmor %vm449, %vm450
    %v452 = vsel %vm451, %v444, %v448
    %v453 = vand.u32 2147483647, %v361
    %vm454 = vcmp.eq.f32.partialorder %v453, 8.507059e+37
    %v455 = vand.u32 %v361, 2147483648
    %v456 = vor.u32 1.1754944e-38, %v455
    %v457 = vsel %vm454, %v456, %v452
    %v458 = vmul.f32 %v329, %v457
    %v459 = vrcp.pop %v363
    %v460 = vmul.f32 %v363, %v459
    %v461 = vsub.f32 1.0, %v460
    %v462 = vmul.f32 %v459, %v461
    %v463 = vadd.f32 %v459, %v462
    %vm464 = vweird.f32 %v363
    %vm465 = vweird.f32 %v459
    %vm466 = vmor %vm464, %vm465
    %v467 = vsel %vm466, %v459, %v463
    %v468 = vand.u32 2147483647, %v363
    %vm469 = vcmp.eq.f32.partialorder %v468, 8.507059e+37
    %v470 = vand.u32 %v363, 2147483648
    %v471 = vor.u32 1.1754944e-38, %v470
    %v472 = vsel %vm469, %v471, %v467
    %v473 = vmul.f32 %v331, %v472
    %v474 = vrcp.pop %v365
    %v475 = vmul.f32 %v365, %v474
    %v476 = vsub.f32 1.0, %v475
    %v477 = vmul.f32 %v474, %v476
    %v478 = vadd.f32 %v474, %v477
    %vm479 = vweird.f32 %v365
    %vm480 = vweird.f32 %v474
    %vm481 = vmor %vm479, %vm480
    %v482 = vsel %vm481, %v474, %v478
    %v483 = vand.u32 2147483647, %v365
    %vm484 = vcmp.eq.f32.partialorder %v483, 8.507059e+37
    %v485 = vand.u32 %v365, 2147483648
    %v486 = vor.u32 1.1754944e-38, %v485
    %v487 = vsel %vm484, %v486, %v482
    %v488 = vmul.f32 %v333, %v487
    %v489 = vrcp.pop %v367
    %v490 = vmul.f32 %v367, %v489
    %v491 = vsub.f32 1.0, %v490
    %v492 = vmul.f32 %v489, %v491
    %v493 = vadd.f32 %v489, %v492
    %vm494 = vweird.f32 %v367
    %vm495 = vweird.f32 %v489
    %vm496 = vmor %vm494, %vm495
    %v497 = vsel %vm496, %v489, %v493
    %v498 = vand.u32 2147483647, %v367
    %vm499 = vcmp.eq.f32.partialorder %v498, 8.507059e+37
    %v500 = vand.u32 %v367, 2147483648
    %v501 = vor.u32 1.1754944e-38, %v500
    %v502 = vsel %vm499, %v501, %v497
    %v503 = vmul.f32 %v335, %v502
    %v504 = vrcp.pop %v369
    %v505 = vmul.f32 %v369, %v504
    %v506 = vsub.f32 1.0, %v505
    %v507 = vmul.f32 %v504, %v506
    %v508 = vadd.f32 %v504, %v507
    %vm509 = vweird.f32 %v369
    %vm510 = vweird.f32 %v504
    %vm511 = vmor %vm509, %vm510
    %v512 = vsel %vm511, %v504, %v508
    %v513 = vand.u32 2147483647, %v369
    %vm514 = vcmp.eq.f32.partialorder %v513, 8.507059e+37
    %v515 = vand.u32 %v369, 2147483648
    %v516 = vor.u32 1.1754944e-38, %v515
    %v517 = vsel %vm514, %v516, %v512
    %v518 = vmul.f32 %v337, %v517
    %v519 = vrcp.pop %v371
    %v520 = vmul.f32 %v371, %v519
    %v521 = vsub.f32 1.0, %v520
    %v522 = vmul.f32 %v519, %v521
    %v523 = vadd.f32 %v519, %v522
    %vm524 = vweird.f32 %v371
    %vm525 = vweird.f32 %v519
    %vm526 = vmor %vm524, %vm525
    %v527 = vsel %vm526, %v519, %v523
    %v528 = vand.u32 2147483647, %v371
    %vm529 = vcmp.eq.f32.partialorder %v528, 8.507059e+37
    %v530 = vand.u32 %v371, 2147483648
    %v531 = vor.u32 1.1754944e-38, %v530
    %v532 = vsel %vm529, %v531, %v527
    %v533 = vmul.f32 %v339, %v532
    %v534 = vrcp.pop %v373
    %v535 = vmul.f32 %v373, %v534
    %v536 = vsub.f32 1.0, %v535
    %v537 = vmul.f32 %v534, %v536
    %v538 = vadd.f32 %v534, %v537
    %vm539 = vweird.f32 %v373
    %vm540 = vweird.f32 %v534
    %vm541 = vmor %vm539, %vm540
    %v542 = vsel %vm541, %v534, %v538
    %v543 = vand.u32 2147483647, %v373
    %vm544 = vcmp.eq.f32.partialorder %v543, 8.507059e+37
    %v545 = vand.u32 %v373, 2147483648
    %v546 = vor.u32 1.1754944e-38, %v545
    %v547 = vsel %vm544, %v546, %v542
    %v548 = vmul.f32 %v341, %v547
    %v549 = vrcp.pop %v375
    %v550 = vmul.f32 %v375, %v549
    %v551 = vsub.f32 1.0, %v550
    %v552 = vmul.f32 %v549, %v551
    %v553 = vadd.f32 %v549, %v552
    %vm554 = vweird.f32 %v375
    %vm555 = vweird.f32 %v549
    %vm556 = vmor %vm554, %vm555
    %v557 = vsel %vm556, %v549, %v553
    %v558 = vand.u32 2147483647, %v375
    %vm559 = vcmp.eq.f32.partialorder %v558, 8.507059e+37
    %v560 = vand.u32 %v375, 2147483648
    %v561 = vor.u32 1.1754944e-38, %v560
    %v562 = vsel %vm559, %v561, %v557
    %v563 = vmul.f32 %v343, %v562
    %v564 = vrcp.pop %v377
    %v565 = vmul.f32 %v377, %v564
    %v566 = vsub.f32 1.0, %v565
    %v567 = vmul.f32 %v564, %v566
    %v568 = vadd.f32 %v564, %v567
    %vm569 = vweird.f32 %v377
    %vm570 = vweird.f32 %v564
    %vm571 = vmor %vm569, %vm570
    %v572 = vsel %vm571, %v564, %v568
    %v573 = vand.u32 2147483647, %v377
    %vm574 = vcmp.eq.f32.partialorder %v573, 8.507059e+37
    %v575 = vand.u32 %v377, 2147483648
    %v576 = vor.u32 1.1754944e-38, %v575
    %v577 = vsel %vm574, %v576, %v572
    %v578 = vmul.f32 %v345, %v577
    %v579 = vrcp.pop %v379
    %v580 = vmul.f32 %v379, %v579
    %v581 = vsub.f32 1.0, %v580
    %v582 = vmul.f32 %v579, %v581
    %v583 = vadd.f32 %v579, %v582
    %vm584 = vweird.f32 %v379
    %vm585 = vweird.f32 %v579
    %vm586 = vmor %vm584, %vm585
    %v587 = vsel %vm586, %v579, %v583
    %v588 = vand.u32 2147483647, %v379
    %vm589 = vcmp.eq.f32.partialorder %v588, 8.507059e+37
    %v590 = vand.u32 %v379, 2147483648
    %v591 = vor.u32 1.1754944e-38, %v590
    %v592 = vsel %vm589, %v591, %v587
    %v593 = vmul.f32 %v347, %v592
    %v594 = vrcp.pop %v381
    %v595 = vmul.f32 %v381, %v594
    %v596 = vsub.f32 1.0, %v595
    %v597 = vmul.f32 %v594, %v596
    %v598 = vadd.f32 %v594, %v597
    %vm599 = vweird.f32 %v381
    %vm600 = vweird.f32 %v594
    %vm601 = vmor %vm599, %vm600
    %v602 = vsel %vm601, %v594, %v598
    %v603 = vand.u32 2147483647, %v381
    %vm604 = vcmp.eq.f32.partialorder %v603, 8.507059e+37
    %v605 = vand.u32 %v381, 2147483648
    %v606 = vor.u32 1.1754944e-38, %v605
    %v607 = vsel %vm604, %v606, %v602
    %v608 = vmul.f32 %v349, %v607
    %v609 = vrcp.pop %v383
    %v610 = vmul.f32 %v383, %v609
    %v611 = vsub.f32 1.0, %v610
    %v612 = vmul.f32 %v609, %v611
    %v613 = vadd.f32 %v609, %v612
    %vm614 = vweird.f32 %v383
    %vm615 = vweird.f32 %v609
    %vm616 = vmor %vm614, %vm615
    %v617 = vsel %vm616, %v609, %v613
    %v618 = vand.u32 2147483647, %v383
    %vm619 = vcmp.eq.f32.partialorder %v618, 8.507059e+37
    %v620 = vand.u32 %v383, 2147483648
    %v621 = vor.u32 1.1754944e-38, %v620
    %v622 = vsel %vm619, %v621, %v617
    %v623 = vmul.f32 %v351, %v622
    %v624 = vadd.f32 %v398, %v413
    %v625 = vadd.f32 %v624, %v428
    %v626 = vadd.f32 %v625, %v443
    %v627 = vadd.f32 %v626, %v458
    %v628 = vadd.f32 %v627, %v473
    %v629 = vadd.f32 %v628, %v488
    %v630 = vadd.f32 %v629, %v503
    %v631 = vadd.f32 %v630, %v518
    %v632 = vadd.f32 %v631, %v533
    %v633 = vadd.f32 %v632, %v548
    %v634 = vadd.f32 %v633, %v563
    %v635 = vadd.f32 %v634, %v578
    %v636 = vadd.f32 %v635, %v593
    %v637 = vadd.f32 %v636, %v608
    %v638 = vadd.f32 %v637, %v623
    %v639 = vrot.slane %v638, 4
    %v640 = vadd.f32 %v638, %v639
    %v641 = vrot.slane %v640, 2
    %v642 = vadd.f32 %v640, %v641
    %v643 = vrot.slane %v642, 1
    %v644 = vadd.f32 %v642, %v643
    %v645 = vadd.f32 %v644, 1e-09
    %v646 = vrcp.pop %v645
    %v647 = vmul.f32 %v398, %v646
    %v648 = vmul.f32 %v413, %v646
    %v649 = vmul.f32 %v428, %v646
    %v650 = vmul.f32 %v443, %v646
    %v651 = vmul.f32 %v458, %v646
    %v652 = vmul.f32 %v473, %v646
    %v653 = vmul.f32 %v488, %v646
    %v654 = vmul.f32 %v503, %v646
    %v655 = vmul.f32 %v518, %v646
    %v656 = vmul.f32 %v533, %v646
    %v657 = vmul.f32 %v548, %v646
    %v658 = vmul.f32 %v563, %v646
    %v659 = vmul.f32 %v578, %v646
    %v660 = vmul.f32 %v593, %v646
    %v661 = vmul.f32 %v608, %v646
    %v662 = vmul.f32 %v623, %v646
    %v663 = vpack.c.bf16 %v124, %v123
    %v664 = vpack.c.bf16 %v126, %v125
    %v665 = vpack.c.bf16 %v648, %v647
    %v666 = vpack.c.bf16 %v650, %v649
    %v667 = vpack.c.bf16 %v652, %v651
    %v668 = vpack.c.bf16 %v654, %v653
    %v669 = vpack.c.bf16 %v656, %v655
    %v670 = vpack.c.bf16 %v658, %v657
    %v671 = vpack.c.bf16 %v660, %v659
    %v672 = vpack.c.bf16 %v662, %v661
    %673 = vmatpush.bf16.msra.mxu0 %v672
    %674 = vmatpush.bf16.msra.mxu0 %v671
    %675 = vmatpush.bf16.msra.mxu0 %v670
    %676 = vmatpush.bf16.msra.mxu0 %v669
    %677 = vmatpush.bf16.msra.mxu0 %v668
    %678 = vmatpush.bf16.msra.mxu0 %v667
    %679 = vmatpush.bf16.msra.mxu0 %v666
    %680 = vmatpush.bf16.msra.mxu0 %v665
    %681 = vmatmul.bf16.gmra.mxu0 %v663
    %v682 = vpop.f32.mrf.mxu0
    %v683 = vadd.f32 0.0, %v682
    %v684 = vpop.f32.mrf.mxu0
    %v685 = vadd.f32 0.0, %v684
    %686 = vmatmul.bf16.gmra.mxu0 %v664
    %v687 = vpop.f32.mrf.mxu0
    %v688 = vadd.f32 0.0, %v687
    %v689 = vpop.f32.mrf.mxu0
    %v690 = vadd.f32 0.0, %v689
    %691 = vdwg.mxu0
    %v692 = vsub.f32 %v35, %v683
    %v693 = vsub.f32 %v36, %v685
    %v694 = vsub.f32 %v37, %v688
    %v695 = vsub.f32 %v38, %v690
    %v696 = vld [vmem:[%s0 + $0x8] sm:$0xff]
    %v697 = vld [vmem:[%s0 + $0x18] sm:$0xff]
    %v698 = vld [vmem:[%s0 + $0x28] sm:$0xff]
    %v699 = vld [vmem:[%s0 + $0x38] sm:$0xff]
    %v700 = vpack.c.bf16 %v697, %v696
    %v701 = vpack.c.bf16 %v699, %v698
    %702 = vmatpush.bf16.msra.mxu0 0
    %703 = vmatpush.bf16.msra.mxu0 0
    %704 = vmatpush.bf16.msra.mxu0 0
    %705 = vmatpush.bf16.msra.mxu0 0
    %706 = vmatpush.bf16.msra.mxu0 0
    %707 = vmatpush.bf16.msra.mxu0 0
    %708 = vmatpush.bf16.msra.mxu0 %v701
    %709 = vmatpush.bf16.msra.mxu0 %v700
    %710 = vmatmul.bf16.gmra.mxu0 %v63
    %v711 = vpop.f32.mrf.mxu0
    %v712 = vadd.f32 0.0, %v711
    %v713 = vpop.f32.mrf.mxu0
    %v714 = vadd.f32 0.0, %v713
    %715 = vmatmul.bf16.gmra.mxu0 %v66
    %v716 = vpop.f32.mrf.mxu0
    %v717 = vadd.f32 0.0, %v716
    %v718 = vpop.f32.mrf.mxu0
    %v719 = vadd.f32 0.0, %v718
    %720 = vmatmul.bf16.gmra.mxu0 %v69
    %v721 = vpop.f32.mrf.mxu0
    %v722 = vadd.f32 0.0, %v721
    %v723 = vpop.f32.mrf.mxu0
    %v724 = vadd.f32 0.0, %v723
    %725 = vmatmul.bf16.gmra.mxu0 %v72
    %v726 = vpop.f32.mrf.mxu0
    %v727 = vadd.f32 0.0, %v726
    %v728 = vpop.f32.mrf.mxu0
    %v729 = vadd.f32 0.0, %v728
    %730 = vdwg.mxu0
    %v731 = vadd.f32 %v722, %v106
    %v732 = vadd.f32 %v724, %v111
    %v733 = vadd.f32 %v727, %v116
    %v734 = vadd.f32 %v729, %v121
    %735 = vxpose.xlu0.b32.start [1/16] %v696, 128
    %736 = vxpose.xlu0.b32.cont [2/16] %v697, 128
    %737 = vxpose.xlu0.b32.cont [3/16] %v698, 128
    %738 = vxpose.xlu0.b32.cont [4/16] %v699, 128
    %739 = vxpose.xlu0.b32.cont [5/16] 0.0, 128
    %740 = vxpose.xlu0.b32.cont [6/16] 0.0, 128
    %741 = vxpose.xlu0.b32.cont [7/16] 0.0, 128
    %742 = vxpose.xlu0.b32.cont [8/16] 0.0, 128
    %743 = vxpose.xlu0.b32.cont [9/16] 0.0, 128
    %744 = vxpose.xlu0.b32.cont [10/16] 0.0, 128
    %745 = vxpose.xlu0.b32.cont [11/16] 0.0, 128
    %746 = vxpose.xlu0.b32.cont [12/16] 0.0, 128
    %747 = vxpose.xlu0.b32.cont [13/16] 0.0, 128
    %748 = vxpose.xlu0.b32.cont [14/16] 0.0, 128
    %749 = vxpose.xlu0.b32.cont [15/16] 0.0, 128
    %750 = vxpose.xlu0.b32.end [16/16] 0.0, 128
    %v751 = vpop.trf.xlu0
    %v752 = vpop.trf.xlu0
    %v753 = vpop.trf.xlu0
    %v754 = vpop.trf.xlu0
    %v755 = vpop.trf.xlu0
    %v756 = vpop.trf.xlu0
    %v757 = vpop.trf.xlu0
    %v758 = vpop.trf.xlu0
    %v759 = vpop.trf.xlu0
    %v760 = vpop.trf.xlu0
    %v761 = vpop.trf.xlu0
    %v762 = vpop.trf.xlu0
    %v763 = vpop.trf.xlu0
    %v764 = vpop.trf.xlu0
    %v765 = vpop.trf.xlu0
    %v766 = vpop.trf.xlu0
    %v768 = vsel %vm61, %v751, 0
    %v771 = vsel %vm61, %v752, 0
    %v774 = vsel %vm61, %v753, 0
    %v777 = vsel %vm61, %v754, 0
    %v780 = vsel %vm61, %v755, 0
    %v783 = vsel %vm61, %v756, 0
    %v786 = vsel %vm61, %v757, 0
    %v789 = vsel %vm61, %v758, 0
    %v792 = vsel %vm61, %v759, 0
    %v795 = vsel %vm61, %v760, 0
    %v798 = vsel %vm61, %v761, 0
    %v801 = vsel %vm61, %v762, 0
    %v804 = vsel %vm61, %v763, 0
    %v807 = vsel %vm61, %v764, 0
    %v810 = vsel %vm61, %v765, 0
    %v813 = vsel %vm61, %v766, 0
    %815 = vmatpush.msra.mxu0 0.0
    %816 = vmatpush.msra.mxu0 0.0
    %817 = vmatpush.msra.mxu0 0.0
    %818 = vmatpush.msra.mxu0 0.0
    %819 = vmatpush.msra.mxu0 0.0
    %820 = vmatpush.msra.mxu0 0.0
    %821 = vmatpush.msra.mxu0 0.0
    %822 = vmatpush.msra.mxu0 0.0
    %823 = vmatpush.msra.mxu0 0.0
    %824 = vmatpush.msra.mxu0 0.0
    %825 = vmatpush.msra.mxu0 0.0
    %826 = vmatpush.msra.mxu0 0.0
    %827 = vmatpush.msra.mxu0 %v719
    %828 = vmatpush.msra.mxu0 %v717
    %829 = vmatpush.msra.mxu0 %v714
    %830 = vmatpush.msra.mxu0 %v712
    %831 = vmatmul.f32.gmra.mxu0 %v768
    %v832 = vpop.f32.mrf.mxu0
    %v833 = vadd.f32 0.0, %v832
    %834 = vmatmul.f32.gmra.mxu0 %v771
    %v835 = vpop.f32.mrf.mxu0
    %v836 = vadd.f32 0.0, %v835
    %837 = vmatmul.f32.gmra.mxu0 %v774
    %v838 = vpop.f32.mrf.mxu0
    %v839 = vadd.f32 0.0, %v838
    %840 = vmatmul.f32.gmra.mxu0 %v777
    %v841 = vpop.f32.mrf.mxu0
    %v842 = vadd.f32 0.0, %v841
    %843 = vmatmul.f32.gmra.mxu0 %v780
    %v844 = vpop.f32.mrf.mxu0
    %v845 = vadd.f32 0.0, %v844
    %846 = vmatmul.f32.gmra.mxu0 %v783
    %v847 = vpop.f32.mrf.mxu0
    %v848 = vadd.f32 0.0, %v847
    %849 = vmatmul.f32.gmra.mxu0 %v786
    %v850 = vpop.f32.mrf.mxu0
    %v851 = vadd.f32 0.0, %v850
    %852 = vmatmul.f32.gmra.mxu0 %v789
    %v853 = vpop.f32.mrf.mxu0
    %v854 = vadd.f32 0.0, %v853
    %855 = vmatmul.f32.gmra.mxu0 %v792
    %v856 = vpop.f32.mrf.mxu0
    %v857 = vadd.f32 0.0, %v856
    %858 = vmatmul.f32.gmra.mxu0 %v795
    %v859 = vpop.f32.mrf.mxu0
    %v860 = vadd.f32 0.0, %v859
    %861 = vmatmul.f32.gmra.mxu0 %v798
    %v862 = vpop.f32.mrf.mxu0
    %v863 = vadd.f32 0.0, %v862
    %864 = vmatmul.f32.gmra.mxu0 %v801
    %v865 = vpop.f32.mrf.mxu0
    %v866 = vadd.f32 0.0, %v865
    %867 = vmatmul.f32.gmra.mxu0 %v804
    %v868 = vpop.f32.mrf.mxu0
    %v869 = vadd.f32 0.0, %v868
    %870 = vmatmul.f32.gmra.mxu0 %v807
    %v871 = vpop.f32.mrf.mxu0
    %v872 = vadd.f32 0.0, %v871
    %873 = vmatmul.f32.gmra.mxu0 %v810
    %v874 = vpop.f32.mrf.mxu0
    %v875 = vadd.f32 0.0, %v874
    %876 = vmatmul.f32.gmra.mxu0 %v813
    %v877 = vpop.f32.mrf.mxu0
    %v878 = vadd.f32 0.0, %v877
    %879 = vdwg.mxu0
    %880 = vmax.xlane.f32.xlu0 %v833
    %v881 = vpop.xlane.xlu0 %880
    %882 = vmax.xlane.f32.xlu0 %v836
    %v883 = vpop.xlane.xlu0 %882
    %884 = vmax.xlane.f32.xlu0 %v839
    %v885 = vpop.xlane.xlu0 %884
    %886 = vmax.xlane.f32.xlu0 %v842
    %v887 = vpop.xlane.xlu0 %886
    %888 = vmax.xlane.f32.xlu0 %v845
    %v889 = vpop.xlane.xlu0 %888
    %890 = vmax.xlane.f32.xlu0 %v848
    %v891 = vpop.xlane.xlu0 %890
    %892 = vmax.xlane.f32.xlu0 %v851
    %v893 = vpop.xlane.xlu0 %892
    %894 = vmax.xlane.f32.xlu0 %v854
    %v895 = vpop.xlane.xlu0 %894
    %896 = vmax.xlane.f32.xlu0 %v857
    %v897 = vpop.xlane.xlu0 %896
    %898 = vmax.xlane.f32.xlu0 %v860
    %v899 = vpop.xlane.xlu0 %898
    %900 = vmax.xlane.f32.xlu0 %v863
    %v901 = vpop.xlane.xlu0 %900
    %902 = vmax.xlane.f32.xlu0 %v866
    %v903 = vpop.xlane.xlu0 %902
    %904 = vmax.xlane.f32.xlu0 %v869
    %v905 = vpop.xlane.xlu0 %904
    %906 = vmax.xlane.f32.xlu0 %v872
    %v907 = vpop.xlane.xlu0 %906
    %908 = vmax.xlane.f32.xlu0 %v875
    %v909 = vpop.xlane.xlu0 %908
    %910 = vmax.xlane.f32.xlu0 %v878
    %v911 = vpop.xlane.xlu0 %910
    %v912 = vsub.f32 %v833, %v881
    %v913 = vsub.f32 %v836, %v883
    %v914 = vsub.f32 %v839, %v885
    %v915 = vsub.f32 %v842, %v887
    %v916 = vsub.f32 %v845, %v889
    %v917 = vsub.f32 %v848, %v891
    %v918 = vsub.f32 %v851, %v893
    %v919 = vsub.f32 %v854, %v895
    %v920 = vsub.f32 %v857, %v897
    %v921 = vsub.f32 %v860, %v899
    %v922 = vsub.f32 %v863, %v901
    %v923 = vsub.f32 %v866, %v903
    %v924 = vsub.f32 %v869, %v905
    %v925 = vsub.f32 %v872, %v907
    %v926 = vsub.f32 %v875, %v909
    %v927 = vsub.f32 %v878, %v911
    %v928 = vmul.f32 %v912, 1.442695
    %v929 = vpow.pop %v928
    %v930 = vmul.f32 %v913, 1.442695
    %v931 = vpow.pop %v930
    %v932 = vmul.f32 %v914, 1.442695
    %v933 = vpow.pop %v932
    %v934 = vmul.f32 %v915, 1.442695
    %v935 = vpow.pop %v934
    %v936 = vmul.f32 %v916, 1.442695
    %v937 = vpow.pop %v936
    %v938 = vmul.f32 %v917, 1.442695
    %v939 = vpow.pop %v938
    %v940 = vmul.f32 %v918, 1.442695
    %v941 = vpow.pop %v940
    %v942 = vmul.f32 %v919, 1.442695
    %v943 = vpow.pop %v942
    %v944 = vmul.f32 %v920, 1.442695
    %v945 = vpow.pop %v944
    %v946 = vmul.f32 %v921, 1.442695
    %v947 = vpow.pop %v946
    %v948 = vmul.f32 %v922, 1.442695
    %v949 = vpow.pop %v948
    %v950 = vmul.f32 %v923, 1.442695
    %v951 = vpow.pop %v950
    %v952 = vmul.f32 %v924, 1.442695
    %v953 = vpow.pop %v952
    %v954 = vmul.f32 %v925, 1.442695
    %v955 = vpow.pop %v954
    %v956 = vmul.f32 %v926, 1.442695
    %v957 = vpow.pop %v956
    %v958 = vmul.f32 %v927, 1.442695
    %v959 = vpow.pop %v958
    %960 = vadd.xlane.f32.xlu0 %v929
    %v961 = vpop.xlane.xlu0 %960
    %962 = vadd.xlane.f32.xlu0 %v931
    %v963 = vpop.xlane.xlu0 %962
    %964 = vadd.xlane.f32.xlu0 %v933
    %v965 = vpop.xlane.xlu0 %964
    %966 = vadd.xlane.f32.xlu0 %v935
    %v967 = vpop.xlane.xlu0 %966
    %968 = vadd.xlane.f32.xlu0 %v937
    %v969 = vpop.xlane.xlu0 %968
    %970 = vadd.xlane.f32.xlu0 %v939
    %v971 = vpop.xlane.xlu0 %970
    %972 = vadd.xlane.f32.xlu0 %v941
    %v973 = vpop.xlane.xlu0 %972
    %974 = vadd.xlane.f32.xlu0 %v943
    %v975 = vpop.xlane.xlu0 %974
    %976 = vadd.xlane.f32.xlu0 %v945
    %v977 = vpop.xlane.xlu0 %976
    %978 = vadd.xlane.f32.xlu0 %v947
    %v979 = vpop.xlane.xlu0 %978
    %980 = vadd.xlane.f32.xlu0 %v949
    %v981 = vpop.xlane.xlu0 %980
    %982 = vadd.xlane.f32.xlu0 %v951
    %v983 = vpop.xlane.xlu0 %982
    %984 = vadd.xlane.f32.xlu0 %v953
    %v985 = vpop.xlane.xlu0 %984
    %986 = vadd.xlane.f32.xlu0 %v955
    %v987 = vpop.xlane.xlu0 %986
    %988 = vadd.xlane.f32.xlu0 %v957
    %v989 = vpop.xlane.xlu0 %988
    %990 = vadd.xlane.f32.xlu0 %v959
    %v991 = vpop.xlane.xlu0 %990
    %v992 = vrcp.pop %v961
    %v993 = vmul.f32 %v961, %v992
    %v994 = vsub.f32 1.0, %v993
    %v995 = vmul.f32 %v992, %v994
    %v996 = vadd.f32 %v992, %v995
    %vm997 = vweird.f32 %v961
    %vm998 = vweird.f32 %v992
    %vm999 = vmor %vm997, %vm998
    %v1000 = vsel %vm999, %v992, %v996
    %v1001 = vand.u32 2147483647, %v961
    %vm1002 = vcmp.eq.f32.partialorder %v1001, 8.507059e+37
    %v1003 = vand.u32 %v961, 2147483648
    %v1004 = vor.u32 1.1754944e-38, %v1003
    %v1005 = vsel %vm1002, %v1004, %v1000
    %v1006 = vmul.f32 %v929, %v1005
    %v1007 = vrcp.pop %v963
    %v1008 = vmul.f32 %v963, %v1007
    %v1009 = vsub.f32 1.0, %v1008
    %v1010 = vmul.f32 %v1007, %v1009
    %v1011 = vadd.f32 %v1007, %v1010
    %vm1012 = vweird.f32 %v963
    %vm1013 = vweird.f32 %v1007
    %vm1014 = vmor %vm1012, %vm1013
    %v1015 = vsel %vm1014, %v1007, %v1011
    %v1016 = vand.u32 2147483647, %v963
    %vm1017 = vcmp.eq.f32.partialorder %v1016, 8.507059e+37
    %v1018 = vand.u32 %v963, 2147483648
    %v1019 = vor.u32 1.1754944e-38, %v1018
    %v1020 = vsel %vm1017, %v1019, %v1015
    %v1021 = vmul.f32 %v931, %v1020
    %v1022 = vrcp.pop %v965
    %v1023 = vmul.f32 %v965, %v1022
    %v1024 = vsub.f32 1.0, %v1023
    %v1025 = vmul.f32 %v1022, %v1024
    %v1026 = vadd.f32 %v1022, %v1025
    %vm1027 = vweird.f32 %v965
    %vm1028 = vweird.f32 %v1022
    %vm1029 = vmor %vm1027, %vm1028
    %v1030 = vsel %vm1029, %v1022, %v1026
    %v1031 = vand.u32 2147483647, %v965
    %vm1032 = vcmp.eq.f32.partialorder %v1031, 8.507059e+37
    %v1033 = vand.u32 %v965, 2147483648
    %v1034 = vor.u32 1.1754944e-38, %v1033
    %v1035 = vsel %vm1032, %v1034, %v1030
    %v1036 = vmul.f32 %v933, %v1035
    %v1037 = vrcp.pop %v967
    %v1038 = vmul.f32 %v967, %v1037
    %v1039 = vsub.f32 1.0, %v1038
    %v1040 = vmul.f32 %v1037, %v1039
    %v1041 = vadd.f32 %v1037, %v1040
    %vm1042 = vweird.f32 %v967
    %vm1043 = vweird.f32 %v1037
    %vm1044 = vmor %vm1042, %vm1043
    %v1045 = vsel %vm1044, %v1037, %v1041
    %v1046 = vand.u32 2147483647, %v967
    %vm1047 = vcmp.eq.f32.partialorder %v1046, 8.507059e+37
    %v1048 = vand.u32 %v967, 2147483648
    %v1049 = vor.u32 1.1754944e-38, %v1048
    %v1050 = vsel %vm1047, %v1049, %v1045
    %v1051 = vmul.f32 %v935, %v1050
    %v1052 = vrcp.pop %v969
    %v1053 = vmul.f32 %v969, %v1052
    %v1054 = vsub.f32 1.0, %v1053
    %v1055 = vmul.f32 %v1052, %v1054
    %v1056 = vadd.f32 %v1052, %v1055
    %vm1057 = vweird.f32 %v969
    %vm1058 = vweird.f32 %v1052
    %vm1059 = vmor %vm1057, %vm1058
    %v1060 = vsel %vm1059, %v1052, %v1056
    %v1061 = vand.u32 2147483647, %v969
    %vm1062 = vcmp.eq.f32.partialorder %v1061, 8.507059e+37
    %v1063 = vand.u32 %v969, 2147483648
    %v1064 = vor.u32 1.1754944e-38, %v1063
    %v1065 = vsel %vm1062, %v1064, %v1060
    %v1066 = vmul.f32 %v937, %v1065
    %v1067 = vrcp.pop %v971
    %v1068 = vmul.f32 %v971, %v1067
    %v1069 = vsub.f32 1.0, %v1068
    %v1070 = vmul.f32 %v1067, %v1069
    %v1071 = vadd.f32 %v1067, %v1070
    %vm1072 = vweird.f32 %v971
    %vm1073 = vweird.f32 %v1067
    %vm1074 = vmor %vm1072, %vm1073
    %v1075 = vsel %vm1074, %v1067, %v1071
    %v1076 = vand.u32 2147483647, %v971
    %vm1077 = vcmp.eq.f32.partialorder %v1076, 8.507059e+37
    %v1078 = vand.u32 %v971, 2147483648
    %v1079 = vor.u32 1.1754944e-38, %v1078
    %v1080 = vsel %vm1077, %v1079, %v1075
    %v1081 = vmul.f32 %v939, %v1080
    %v1082 = vrcp.pop %v973
    %v1083 = vmul.f32 %v973, %v1082
    %v1084 = vsub.f32 1.0, %v1083
    %v1085 = vmul.f32 %v1082, %v1084
    %v1086 = vadd.f32 %v1082, %v1085
    %vm1087 = vweird.f32 %v973
    %vm1088 = vweird.f32 %v1082
    %vm1089 = vmor %vm1087, %vm1088
    %v1090 = vsel %vm1089, %v1082, %v1086
    %v1091 = vand.u32 2147483647, %v973
    %vm1092 = vcmp.eq.f32.partialorder %v1091, 8.507059e+37
    %v1093 = vand.u32 %v973, 2147483648
    %v1094 = vor.u32 1.1754944e-38, %v1093
    %v1095 = vsel %vm1092, %v1094, %v1090
    %v1096 = vmul.f32 %v941, %v1095
    %v1097 = vrcp.pop %v975
    %v1098 = vmul.f32 %v975, %v1097
    %v1099 = vsub.f32 1.0, %v1098
    %v1100 = vmul.f32 %v1097, %v1099
    %v1101 = vadd.f32 %v1097, %v1100
    %vm1102 = vweird.f32 %v975
    %vm1103 = vweird.f32 %v1097
    %vm1104 = vmor %vm1102, %vm1103
    %v1105 = vsel %vm1104, %v1097, %v1101
    %v1106 = vand.u32 2147483647, %v975
    %vm1107 = vcmp.eq.f32.partialorder %v1106, 8.507059e+37
    %v1108 = vand.u32 %v975, 2147483648
    %v1109 = vor.u32 1.1754944e-38, %v1108
    %v1110 = vsel %vm1107, %v1109, %v1105
    %v1111 = vmul.f32 %v943, %v1110
    %v1112 = vrcp.pop %v977
    %v1113 = vmul.f32 %v977, %v1112
    %v1114 = vsub.f32 1.0, %v1113
    %v1115 = vmul.f32 %v1112, %v1114
    %v1116 = vadd.f32 %v1112, %v1115
    %vm1117 = vweird.f32 %v977
    %vm1118 = vweird.f32 %v1112
    %vm1119 = vmor %vm1117, %vm1118
    %v1120 = vsel %vm1119, %v1112, %v1116
    %v1121 = vand.u32 2147483647, %v977
    %vm1122 = vcmp.eq.f32.partialorder %v1121, 8.507059e+37
    %v1123 = vand.u32 %v977, 2147483648
    %v1124 = vor.u32 1.1754944e-38, %v1123
    %v1125 = vsel %vm1122, %v1124, %v1120
    %v1126 = vmul.f32 %v945, %v1125
    %v1127 = vrcp.pop %v979
    %v1128 = vmul.f32 %v979, %v1127
    %v1129 = vsub.f32 1.0, %v1128
    %v1130 = vmul.f32 %v1127, %v1129
    %v1131 = vadd.f32 %v1127, %v1130
    %vm1132 = vweird.f32 %v979
    %vm1133 = vweird.f32 %v1127
    %vm1134 = vmor %vm1132, %vm1133
    %v1135 = vsel %vm1134, %v1127, %v1131
    %v1136 = vand.u32 2147483647, %v979
    %vm1137 = vcmp.eq.f32.partialorder %v1136, 8.507059e+37
    %v1138 = vand.u32 %v979, 2147483648
    %v1139 = vor.u32 1.1754944e-38, %v1138
    %v1140 = vsel %vm1137, %v1139, %v1135
    %v1141 = vmul.f32 %v947, %v1140
    %v1142 = vrcp.pop %v981
    %v1143 = vmul.f32 %v981, %v1142
    %v1144 = vsub.f32 1.0, %v1143
    %v1145 = vmul.f32 %v1142, %v1144
    %v1146 = vadd.f32 %v1142, %v1145
    %vm1147 = vweird.f32 %v981
    %vm1148 = vweird.f32 %v1142
    %vm1149 = vmor %vm1147, %vm1148
    %v1150 = vsel %vm1149, %v1142, %v1146
    %v1151 = vand.u32 2147483647, %v981
    %vm1152 = vcmp.eq.f32.partialorder %v1151, 8.507059e+37
    %v1153 = vand.u32 %v981, 2147483648
    %v1154 = vor.u32 1.1754944e-38, %v1153
    %v1155 = vsel %vm1152, %v1154, %v1150
    %v1156 = vmul.f32 %v949, %v1155
    %v1157 = vrcp.pop %v983
    %v1158 = vmul.f32 %v983, %v1157
    %v1159 = vsub.f32 1.0, %v1158
    %v1160 = vmul.f32 %v1157, %v1159
    %v1161 = vadd.f32 %v1157, %v1160
    %vm1162 = vweird.f32 %v983
    %vm1163 = vweird.f32 %v1157
    %vm1164 = vmor %vm1162, %vm1163
    %v1165 = vsel %vm1164, %v1157, %v1161
    %v1166 = vand.u32 2147483647, %v983
    %vm1167 = vcmp.eq.f32.partialorder %v1166, 8.507059e+37
    %v1168 = vand.u32 %v983, 2147483648
    %v1169 = vor.u32 1.1754944e-38, %v1168
    %v1170 = vsel %vm1167, %v1169, %v1165
    %v1171 = vmul.f32 %v951, %v1170
    %v1172 = vrcp.pop %v985
    %v1173 = vmul.f32 %v985, %v1172
    %v1174 = vsub.f32 1.0, %v1173
    %v1175 = vmul.f32 %v1172, %v1174
    %v1176 = vadd.f32 %v1172, %v1175
    %vm1177 = vweird.f32 %v985
    %vm1178 = vweird.f32 %v1172
    %vm1179 = vmor %vm1177, %vm1178
    %v1180 = vsel %vm1179, %v1172, %v1176
    %v1181 = vand.u32 2147483647, %v985
    %vm1182 = vcmp.eq.f32.partialorder %v1181, 8.507059e+37
    %v1183 = vand.u32 %v985, 2147483648
    %v1184 = vor.u32 1.1754944e-38, %v1183
    %v1185 = vsel %vm1182, %v1184, %v1180
    %v1186 = vmul.f32 %v953, %v1185
    %v1187 = vrcp.pop %v987
    %v1188 = vmul.f32 %v987, %v1187
    %v1189 = vsub.f32 1.0, %v1188
    %v1190 = vmul.f32 %v1187, %v1189
    %v1191 = vadd.f32 %v1187, %v1190
    %vm1192 = vweird.f32 %v987
    %vm1193 = vweird.f32 %v1187
    %vm1194 = vmor %vm1192, %vm1193
    %v1195 = vsel %vm1194, %v1187, %v1191
    %v1196 = vand.u32 2147483647, %v987
    %vm1197 = vcmp.eq.f32.partialorder %v1196, 8.507059e+37
    %v1198 = vand.u32 %v987, 2147483648
    %v1199 = vor.u32 1.1754944e-38, %v1198
    %v1200 = vsel %vm1197, %v1199, %v1195
    %v1201 = vmul.f32 %v955, %v1200
    %v1202 = vrcp.pop %v989
    %v1203 = vmul.f32 %v989, %v1202
    %v1204 = vsub.f32 1.0, %v1203
    %v1205 = vmul.f32 %v1202, %v1204
    %v1206 = vadd.f32 %v1202, %v1205
    %vm1207 = vweird.f32 %v989
    %vm1208 = vweird.f32 %v1202
    %vm1209 = vmor %vm1207, %vm1208
    %v1210 = vsel %vm1209, %v1202, %v1206
    %v1211 = vand.u32 2147483647, %v989
    %vm1212 = vcmp.eq.f32.partialorder %v1211, 8.507059e+37
    %v1213 = vand.u32 %v989, 2147483648
    %v1214 = vor.u32 1.1754944e-38, %v1213
    %v1215 = vsel %vm1212, %v1214, %v1210
    %v1216 = vmul.f32 %v957, %v1215
    %v1217 = vrcp.pop %v991
    %v1218 = vmul.f32 %v991, %v1217
    %v1219 = vsub.f32 1.0, %v1218
    %v1220 = vmul.f32 %v1217, %v1219
    %v1221 = vadd.f32 %v1217, %v1220
    %vm1222 = vweird.f32 %v991
    %vm1223 = vweird.f32 %v1217
    %vm1224 = vmor %vm1222, %vm1223
    %v1225 = vsel %vm1224, %v1217, %v1221
    %v1226 = vand.u32 2147483647, %v991
    %vm1227 = vcmp.eq.f32.partialorder %v1226, 8.507059e+37
    %v1228 = vand.u32 %v991, 2147483648
    %v1229 = vor.u32 1.1754944e-38, %v1228
    %v1230 = vsel %vm1227, %v1229, %v1225
    %v1231 = vmul.f32 %v959, %v1230
    %v1232 = vadd.f32 %v1006, %v1021
    %v1233 = vadd.f32 %v1232, %v1036
    %v1234 = vadd.f32 %v1233, %v1051
    %v1235 = vadd.f32 %v1234, %v1066
    %v1236 = vadd.f32 %v1235, %v1081
    %v1237 = vadd.f32 %v1236, %v1096
    %v1238 = vadd.f32 %v1237, %v1111
    %v1239 = vadd.f32 %v1238, %v1126
    %v1240 = vadd.f32 %v1239, %v1141
    %v1241 = vadd.f32 %v1240, %v1156
    %v1242 = vadd.f32 %v1241, %v1171
    %v1243 = vadd.f32 %v1242, %v1186
    %v1244 = vadd.f32 %v1243, %v1201
    %v1245 = vadd.f32 %v1244, %v1216
    %v1246 = vadd.f32 %v1245, %v1231
    %v1247 = vrot.slane %v1246, 4
    %v1248 = vadd.f32 %v1246, %v1247
    %v1249 = vrot.slane %v1248, 2
    %v1250 = vadd.f32 %v1248, %v1249
    %v1251 = vrot.slane %v1250, 1
    %v1252 = vadd.f32 %v1250, %v1251
    %v1253 = vadd.f32 %v1252, 1e-09
    %v1254 = vrcp.pop %v1253
    %v1255 = vmul.f32 %v1006, %v1254
    %v1256 = vmul.f32 %v1021, %v1254
    %v1257 = vmul.f32 %v1036, %v1254
    %v1258 = vmul.f32 %v1051, %v1254
    %v1259 = vmul.f32 %v1066, %v1254
    %v1260 = vmul.f32 %v1081, %v1254
    %v1261 = vmul.f32 %v1096, %v1254
    %v1262 = vmul.f32 %v1111, %v1254
    %v1263 = vmul.f32 %v1126, %v1254
    %v1264 = vmul.f32 %v1141, %v1254
    %v1265 = vmul.f32 %v1156, %v1254
    %v1266 = vmul.f32 %v1171, %v1254
    %v1267 = vmul.f32 %v1186, %v1254
    %v1268 = vmul.f32 %v1201, %v1254
    %v1269 = vmul.f32 %v1216, %v1254
    %v1270 = vmul.f32 %v1231, %v1254
    %v1271 = vpack.c.bf16 %v732, %v731
    %v1272 = vpack.c.bf16 %v734, %v733
    %v1273 = vpack.c.bf16 %v1256, %v1255
    %v1274 = vpack.c.bf16 %v1258, %v1257
    %v1275 = vpack.c.bf16 %v1260, %v1259
    %v1276 = vpack.c.bf16 %v1262, %v1261
    %v1277 = vpack.c.bf16 %v1264, %v1263
    %v1278 = vpack.c.bf16 %v1266, %v1265
    %v1279 = vpack.c.bf16 %v1268, %v1267
    %v1280 = vpack.c.bf16 %v1270, %v1269
    %1281 = vmatpush.bf16.msra.mxu0 %v1280
    %1282 = vmatpush.bf16.msra.mxu0 %v1279
    %1283 = vmatpush.bf16.msra.mxu0 %v1278
    %1284 = vmatpush.bf16.msra.mxu0 %v1277
    %1285 = vmatpush.bf16.msra.mxu0 %v1276
    %1286 = vmatpush.bf16.msra.mxu0 %v1275
    %1287 = vmatpush.bf16.msra.mxu0 %v1274
    %1288 = vmatpush.bf16.msra.mxu0 %v1273
    %1289 = vmatmul.bf16.gmra.mxu0 %v1271
    %v1290 = vpop.f32.mrf.mxu0
    %v1291 = vadd.f32 0.0, %v1290
    %v1292 = vpop.f32.mrf.mxu0
    %v1293 = vadd.f32 0.0, %v1292
    %1294 = vmatmul.bf16.gmra.mxu0 %v1272
    %v1295 = vpop.f32.mrf.mxu0
    %v1296 = vadd.f32 0.0, %v1295
    %v1297 = vpop.f32.mrf.mxu0
    %v1298 = vadd.f32 0.0, %v1297
    %1299 = vdwg.mxu0
    %v1300 = vsub.f32 %v696, %v1291
    %v1301 = vsub.f32 %v697, %v1293
    %v1302 = vsub.f32 %v698, %v1296
    %v1303 = vsub.f32 %v699, %v1298
    %v1304 = vpack.c.bf16 %v693, %v692
    %v1305 = vpack.c.bf16 %v1301, %v1300
    %v1306 = vpack.c.bf16 %v695, %v694
    %v1307 = vpack.c.bf16 %v1303, %v1302
    %v1312 = vunpack.c.l.b16 %v27
    %v1313 = vunpack.c.l.b16 %v28
    %v1314 = vunpack.c.l.b16 %v29
    %v1315 = vunpack.c.l.b16 %v30
    %v1316 = vpack.c.b16 %v1313, %v1312
    %v1317 = vpack.c.b16 %v1315, %v1314
    %v1319 = vsel %vm61, %v1316, 0
    %v1322 = vsel %vm61, %v1317, 0
    %1324 = vmatpush.bf16.msra.mxu0 0
    %1325 = vmatpush.bf16.msra.mxu0 0
    %1326 = vmatpush.bf16.msra.mxu0 0
    %1327 = vmatpush.bf16.msra.mxu0 0
    %1328 = vmatpush.bf16.msra.mxu0 0
    %1329 = vmatpush.bf16.msra.mxu0 0
    %1330 = vmatpush.bf16.msra.mxu0 %v1306
    %1331 = vmatpush.bf16.msra.mxu0 %v1304
    %1332 = vmatmul.bf16.gmra.mxu0 %v1319
    %v1333 = vpop.f32.mrf.mxu0
    %v1334 = vadd.f32 0.0, %v1333
    %v1335 = vpop.f32.mrf.mxu0
    %v1336 = vadd.f32 0.0, %v1335
    %1337 = vmatmul.bf16.gmra.mxu0 %v1322
    %v1338 = vpop.f32.mrf.mxu0
    %v1339 = vadd.f32 0.0, %v1338
    %v1340 = vpop.f32.mrf.mxu0
    %v1341 = vadd.f32 0.0, %v1340
    %1342 = vdwg.mxu0
    %1343 = vmatpush.bf16.msra.mxu0 0
    %1344 = vmatpush.bf16.msra.mxu0 0
    %1345 = vmatpush.bf16.msra.mxu0 0
    %1346 = vmatpush.bf16.msra.mxu0 0
    %1347 = vmatpush.bf16.msra.mxu0 0
    %1348 = vmatpush.bf16.msra.mxu0 0
    %1349 = vmatpush.bf16.msra.mxu0 %v1307
    %1350 = vmatpush.bf16.msra.mxu0 %v1305
    %1351 = vmatmul.bf16.gmra.mxu0 %v1319
    %v1352 = vpop.f32.mrf.mxu0
    %v1353 = vadd.f32 0.0, %v1352
    %v1354 = vpop.f32.mrf.mxu0
    %v1355 = vadd.f32 0.0, %v1354
    %1356 = vmatmul.bf16.gmra.mxu0 %v1322
    %v1357 = vpop.f32.mrf.mxu0
    %v1358 = vadd.f32 0.0, %v1357
    %v1359 = vpop.f32.mrf.mxu0
    %v1360 = vadd.f32 0.0, %v1359
    %1361 = vdwg.mxu0
    %v1362 = vadd.f32 %v1334, %v1353
    %1363 = vadd.xlane.f32.xlu0 %v1362
    %v1364 = vpop.xlane.xlu0 %1363
    %v1365 = vadd.f32 %v1336, %v1355
    %1366 = vadd.xlane.f32.xlu0 %v1365
    %v1367 = vpop.xlane.xlu0 %1366
    %v1368 = vadd.f32 %v1339, %v1358
    %1369 = vadd.xlane.f32.xlu0 %v1368
    %v1370 = vpop.xlane.xlu0 %1369
    %v1371 = vadd.f32 %v1341, %v1360
    %1372 = vadd.xlane.f32.xlu0 %v1371
    %v1373 = vpop.xlane.xlu0 %1372
    %v1374 = vmul.f32 %v1364, 0.00390625
    %v1375 = vmul.f32 %v1367, 0.00390625
    %v1376 = vmul.f32 %v1370, 0.00390625
    %v1377 = vmul.f32 %v1373, 0.00390625
    %v1378 = vmul.f32 %v1334, %v1334
    %v1379 = vmul.f32 %v1353, %v1353
    %v1380 = vmul.f32 %v1336, %v1336
    %v1381 = vmul.f32 %v1355, %v1355
    %v1382 = vmul.f32 %v1339, %v1339
    %v1383 = vmul.f32 %v1358, %v1358
    %v1384 = vmul.f32 %v1341, %v1341
    %v1385 = vmul.f32 %v1360, %v1360
    %v1386 = vadd.f32 %v1378, %v1379
    %1387 = vadd.xlane.f32.xlu0 %v1386
    %v1388 = vpop.xlane.xlu0 %1387
    %v1389 = vadd.f32 %v1380, %v1381
    %1390 = vadd.xlane.f32.xlu0 %v1389
    %v1391 = vpop.xlane.xlu0 %1390
    %v1392 = vadd.f32 %v1382, %v1383
    %1393 = vadd.xlane.f32.xlu0 %v1392
    %v1394 = vpop.xlane.xlu0 %1393
    %v1395 = vadd.f32 %v1384, %v1385
    %1396 = vadd.xlane.f32.xlu0 %v1395
    %v1397 = vpop.xlane.xlu0 %1396
    %v1398 = vmul.f32 %v1388, 0.00390625
    %v1399 = vmul.f32 %v1391, 0.00390625
    %v1400 = vmul.f32 %v1394, 0.00390625
    %v1401 = vmul.f32 %v1397, 0.00390625
    %v1402 = vmul.f32 %v1374, %v1374
    %v1403 = vmul.f32 %v1375, %v1375
    %v1404 = vmul.f32 %v1376, %v1376
    %v1405 = vmul.f32 %v1377, %v1377
    %v1406 = vsub.f32 %v1398, %v1402
    %v1407 = vsub.f32 %v1399, %v1403
    %v1408 = vsub.f32 %v1400, %v1404
    %v1409 = vsub.f32 %v1401, %v1405
    %v1410 = vadd.f32 %v1406, 1e-05
    %v1411 = vadd.f32 %v1407, 1e-05
    %v1412 = vadd.f32 %v1408, 1e-05
    %v1413 = vadd.f32 %v1409, 1e-05
    %v1414 = vrsqrt.pop %v1410
    %v1415 = vmul.f32 %v1414, %v1410
    %v1416 = vmul.f32 %v1415, %v1414
    %v1417 = vmul.f32 0.5, %v1416
    %v1418 = vsub.f32 1.5, %v1417
    %v1419 = vmul.f32 %v1414, %v1418
    %vm1420 = vweird.f32 %v1410
    %vm1421 = vweird.f32 %v1414
    %vm1422 = vmor %vm1420, %vm1421
    %v1423 = vsel %vm1422, %v1414, %v1419
    %v1424 = vrsqrt.pop %v1411
    %v1425 = vmul.f32 %v1424, %v1411
    %v1426 = vmul.f32 %v1425, %v1424
    %v1427 = vmul.f32 0.5, %v1426
    %v1428 = vsub.f32 1.5, %v1427
    %v1429 = vmul.f32 %v1424, %v1428
    %vm1430 = vweird.f32 %v1411
    %vm1431 = vweird.f32 %v1424
    %vm1432 = vmor %vm1430, %vm1431
    %v1433 = vsel %vm1432, %v1424, %v1429
    %v1434 = vrsqrt.pop %v1412
    %v1435 = vmul.f32 %v1434, %v1412
    %v1436 = vmul.f32 %v1435, %v1434
    %v1437 = vmul.f32 0.5, %v1436
    %v1438 = vsub.f32 1.5, %v1437
    %v1439 = vmul.f32 %v1434, %v1438
    %vm1440 = vweird.f32 %v1412
    %vm1441 = vweird.f32 %v1434
    %vm1442 = vmor %vm1440, %vm1441
    %v1443 = vsel %vm1442, %v1434, %v1439
    %v1444 = vrsqrt.pop %v1413
    %v1445 = vmul.f32 %v1444, %v1413
    %v1446 = vmul.f32 %v1445, %v1444
    %v1447 = vmul.f32 0.5, %v1446
    %v1448 = vsub.f32 1.5, %v1447
    %v1449 = vmul.f32 %v1444, %v1448
    %vm1450 = vweird.f32 %v1413
    %vm1451 = vweird.f32 %v1444
    %vm1452 = vmor %vm1450, %vm1451
    %v1453 = vsel %vm1452, %v1444, %v1449
    %v1454 = vmul.f32 %v31, %v1423
    %v1455 = vmul.f32 %v32, %v1433
    %v1456 = vmul.f32 %v33, %v1443
    %v1457 = vmul.f32 %v34, %v1453
    %v1458 = vmul.f32 %v1374, %v1454
    %v1459 = vmul.f32 %v1375, %v1455
    %v1460 = vmul.f32 %v1376, %v1456
    %v1461 = vmul.f32 %v1377, %v1457
    %1466 = vrot.lane.b32.xlu0 %v1458, 1
    %v1467 = vpop.permute.xlu0 %1466
    %1468 = vrot.lane.b32.xlu0 %v1459, 1
    %v1469 = vpop.permute.xlu0 %1468
    %1470 = vrot.lane.b32.xlu0 %v1460, 1
    %v1471 = vpop.permute.xlu0 %1470
    %1472 = vrot.lane.b32.xlu0 %v1461, 1
    %v1473 = vpop.permute.xlu0 %1472
    %v1478 = vsub.f32 %v31, %v1467
    %v1479 = vsub.f32 %v32, %v1469
    %v1480 = vsub.f32 %v33, %v1471
    %v1481 = vsub.f32 %v34, %v1473
    %1483 = vset.pattern.permute.xlu0 1
    %1484 = vperm.xlu0 %1483, %v1454
    %v1485 = vpop.permute.xlu0 %1484
    %1488 = vset.pattern.permute.xlu0 1
    %1489 = vperm.xlu0 %1488, %v1455
    %v1490 = vpop.permute.xlu0 %1489
    %1493 = vset.pattern.permute.xlu0 1
    %1494 = vperm.xlu0 %1493, %v1456
    %v1495 = vpop.permute.xlu0 %1494
    %1498 = vset.pattern.permute.xlu0 1
    %1499 = vperm.xlu0 %1498, %v1457
    %v1500 = vpop.permute.xlu0 %1499
    %v1502 = vmul.f32 %v1334, %v1485
    %v1503 = vmul.f32 %v1353, %v1485
    %v1504 = vmul.f32 %v1336, %v1490
    %v1505 = vmul.f32 %v1355, %v1490
    %v1506 = vmul.f32 %v1339, %v1495
    %v1507 = vmul.f32 %v1358, %v1495
    %v1508 = vmul.f32 %v1341, %v1500
    %v1509 = vmul.f32 %v1360, %v1500
    %1511 = vset.pattern.permute.xlu0 2
    %1512 = vperm.xlu0 %1511, %v1478
    %v1513 = vpop.permute.xlu0 %1512
    %1516 = vset.pattern.permute.xlu0 2
    %1517 = vperm.xlu0 %1516, %v1479
    %v1518 = vpop.permute.xlu0 %1517
    %1521 = vset.pattern.permute.xlu0 2
    %1522 = vperm.xlu0 %1521, %v1480
    %v1523 = vpop.permute.xlu0 %1522
    %1526 = vset.pattern.permute.xlu0 2
    %1527 = vperm.xlu0 %1526, %v1481
    %v1528 = vpop.permute.xlu0 %1527
    %v1530 = vadd.f32 %v1502, %v1513
    %v1531 = vadd.f32 %v1503, %v1513
    %v1532 = vadd.f32 %v1504, %v1518
    %v1533 = vadd.f32 %v1505, %v1518
    %v1534 = vadd.f32 %v1506, %v1523
    %v1535 = vadd.f32 %v1507, %v1523
    %v1536 = vadd.f32 %v1508, %v1528
    %v1537 = vadd.f32 %v1509, %v1528
    %v1538 = vmax.f32 %v1530, 0.0
    %v1539 = vmax.f32 %v1531, 0.0
    %v1540 = vmax.f32 %v1532, 0.0
    %v1541 = vmax.f32 %v1533, 0.0
    %v1542 = vmax.f32 %v1534, 0.0
    %v1543 = vmax.f32 %v1535, 0.0
    %v1544 = vmax.f32 %v1536, 0.0
    %v1545 = vmax.f32 %v1537, 0.0
    %v1546 = vadd.f32 %v35, %v1538
    %v1547 = vadd.f32 %v36, %v1540
    %v1548 = vadd.f32 %v37, %v1542
    %v1549 = vadd.f32 %v38, %v1544
    %1550 = vst [vmem:[#allocation2] sm:$0xff] %v1546
    %1551 = vst [vmem:[#allocation2 + $0x8] sm:$0xff] %v1547
    %1552 = vst [vmem:[#allocation2 + $0x10] sm:$0xff] %v1548
    %1553 = vst [vmem:[#allocation2 + $0x18] sm:$0xff] %v1549
    %v1554 = vld [vmem:[%s0 + $0x8] sm:$0xff]
    %v1555 = vld [vmem:[%s0 + $0x18] sm:$0xff]
    %v1556 = vld [vmem:[%s0 + $0x28] sm:$0xff]
    %v1557 = vld [vmem:[%s0 + $0x38] sm:$0xff]
    %v1558 = vadd.f32 %v1554, %v1539
    %v1559 = vadd.f32 %v1555, %v1541
    %v1560 = vadd.f32 %v1556, %v1543
    %v1561 = vadd.f32 %v1557, %v1545
    %s1562 = scalar_lea.vmem [#allocation2], 32
    %1563 = vst [vmem:[%s1562] sm:$0xff] %v1558
    %1564 = vst [vmem:[%s1562 + $0x8] sm:$0xff] %v1559
    %1565 = vst [vmem:[%s1562 + $0x10] sm:$0xff] %v1560
    %1566 = vst [vmem:[%s1562 + $0x18] sm:$0xff] %v1561
    // Predicated region
    $region18: #{tpu_custom_call.1} parent=1 // pred_check
      _
    $region19: #{tpu_custom_call.1} parent=1 // pred_check_branch
      %1568 = sbr.rel (0) target = $region21
    $region20: #{tpu_custom_call.1} parent=1 // pred_region
      %1570 = vsyncadd [#allocation3], 0
      %s1571 = sshll.u32 [#allocation2], 4
      %s1572 = int_to_ptr.vmem [resolvable:$true] %s1571
      %s1573 = sshll.u32 %s4, 4
      %s1574 = int_to_ptr.hbm [resolvable:$true] %s1573
      %1579 = dma.vmem_to_hbm [thread:$0]  %s1572, 1024, %s1574, [#allocation3], 128, 128, 8
    $region21: #{tpu_custom_call.1} parent=1 // pred_fallthru
      _
    // Predicated region
    $region22: #{tpu_custom_call.1} parent=1 // pred_check
      _
    $region23: #{tpu_custom_call.1} parent=1 // pred_check_branch
      %1581 = sbr.rel (0) target = $region25
    $region24: #{tpu_custom_call.1} parent=1 // pred_region
      %1583 = dma.done [#allocation3], 1024
    $region25: #{tpu_custom_call.1} parent=1 // pred_fallthru
      _
    %1584 = vsyncpa [#allocation3], 1

</llo_original>
